<compile_context>
chip_gen: v7x
topology: tpu7x:2x2x1
jax: 0.10.0
libtpu: 0.0.40
codegen_flags: <defaults>
</compile_context>

<pallas_src>
import functools

import jax
import jax.numpy as jnp
from jax.experimental import pallas as pl
from jax.experimental.pallas import tpu as pltpu


def _fuse_concat_kernel(w_ref, b_ref, xs_ref, xf_ref, out_ref,
                        *, c_s, t_s, t_f, alpha, k, pad):
    # w_ref  : (k, C_out, C_in)      BN-scale-folded conv taps (resident, tiny)
    # b_ref  : (C_out, 1)            folded BN bias (f32)
    # xs_ref : (C_s, T_s, hw_blk)    slow pathway block (pass-through copy)
    # xf_ref : (C_in, T_f, hw_blk)   fast pathway block (streamed, model dtype)
    # out_ref: (C_s+C_out, T_s, hw_blk) concatenated output block
    c_out = w_ref.shape[1]
    hw_blk = xf_ref.shape[-1]

    # Slow pathway passes straight through into the concat output.
    out_ref[0:c_s, :, :] = xs_ref[...].astype(out_ref.dtype)

    bias = b_ref[...]                       # (C_out, 1), broadcasts over lanes
    for ts in range(t_s):                   # static unroll over output frames
        acc = None
        for dt in range(k):                 # static unroll over temporal taps
            t_in = ts * alpha + dt - pad
            if 0 <= t_in < t_f:             # zero-pad taps dropped at trace time
                contrib = jnp.dot(w_ref[dt], xf_ref[:, t_in, :],
                                  preferred_element_type=jnp.float32)
                acc = contrib if acc is None else acc + contrib
        if acc is None:                     # unreachable for odd k; kept for safety
            acc = jnp.zeros((c_out, hw_blk), jnp.float32)
        out_ref[c_s:c_s + c_out, ts, :] = jnp.maximum(acc + bias, 0.0).astype(
            out_ref.dtype)


def _pick_hw_block(hw, bytes_per_col, n_batch, *,
                   vmem_budget=12 << 20, min_grid_points=2):
    """Largest multiple-of-128 divisor of hw (or full hw) fitting the VMEM budget."""
    cands = sorted({d for d in range(128, hw + 1, 128) if hw % d == 0} | {hw})
    fitting = [d for d in cands if 2 * d * bytes_per_col <= vmem_budget]
    if not fitting:
        fitting = [cands[0]]
    blk = fitting[-1]
    # v7x shards "parallel" grid axes over 2 TensorCores: keep >=2 grid points.
    if n_batch * (hw // blk) < min_grid_points:
        for d in reversed(fitting):
            if n_batch * (hw // d) >= min_grid_points:
                blk = d
                break
    return blk


def fuse_fast_to_slow(x_s, x_f, conv_w, gamma, beta, running_mean, running_var,
                      *, alpha, fusion_kernel, eps=1e-5):
    """x_s: (N, C_s, T_s, H, W); x_f: (N, C_in, T_f, H, W)  (PyTorch NCTHW)."""
    n, c_s, t_s, h, w_dim = x_s.shape
    _, c_in, t_f, _, _ = x_f.shape
    c_out = conv_w.shape[0]
    k = fusion_kernel
    pad = k // 2                     # assumes odd temporal kernel (as in SlowFast)
    hw = h * w_dim
    t_out = (t_f + 2 * pad - k) // alpha + 1
    assert t_out == t_s, "temporal dims must match for channel concat"

    # --- fold eval-mode BN into conv weights + per-channel bias -------------
    inv_std = 1.0 / jnp.sqrt(running_var.astype(jnp.float32) + eps)
    scale = gamma.astype(jnp.float32) * inv_std                        # (C_out,)
    bias = beta.astype(jnp.float32) - running_mean.astype(jnp.float32) * scale
    # (C_out, C_in, k, 1, 1) -> (k, C_out, C_in), BN-scaled; keep streamed dtype.
    w_koc = conv_w[:, :, :, 0, 0].astype(jnp.float32).transpose(2, 0, 1)
    w_koc = (w_koc * scale[None, :, None]).astype(x_f.dtype)
    bias2 = bias.reshape(c_out, 1)                                     # f32

    # --- free trailing-dim reshapes (NCTHW -> NCT(HW)) -----------------------
    xs4 = x_s.reshape(n, c_s, t_s, hw)
    xf4 = x_f.reshape(n, c_in, t_f, hw)

    # --- lane (H*W) tiling ----------------------------------------------------
    bytes_per_col = (c_s * t_s * x_s.dtype.itemsize
                     + c_in * t_f * x_f.dtype.itemsize
                     + (c_s + c_out) * t_s * x_s.dtype.itemsize)
    hw_blk = _pick_hw_block(hw, bytes_per_col, n)
    n_hw_blocks = hw // hw_blk

    kernel = functools.partial(_fuse_concat_kernel, c_s=c_s, t_s=t_s, t_f=t_f,
                               alpha=alpha, k=k, pad=pad)

    cost = pl.CostEstimate(
        flops=2 * n * c_out * c_in * k * t_s * hw,
        transcendentals=0,
        bytes_accessed=(xs4.size * x_s.dtype.itemsize
                        + xf4.size * x_f.dtype.itemsize
                        + n * (c_s + c_out) * t_s * hw * x_s.dtype.itemsize
                        + w_koc.size * w_koc.dtype.itemsize
                        + bias2.size * 4),
    )

    out = pl.pallas_call(
        kernel,
        out_shape=jax.ShapeDtypeStruct((n, c_s + c_out, t_s, hw), x_s.dtype),
        grid=(n, n_hw_blocks),
        in_specs=[
            pl.BlockSpec((k, c_out, c_in), lambda i, j: (0, 0, 0)),
            pl.BlockSpec((c_out, 1), lambda i, j: (0, 0)),
            pl.BlockSpec((None, c_s, t_s, hw_blk), lambda i, j: (i, 0, 0, j)),
            pl.BlockSpec((None, c_in, t_f, hw_blk), lambda i, j: (i, 0, 0, j)),
        ],
        out_specs=pl.BlockSpec((None, c_s + c_out, t_s, hw_blk),
                               lambda i, j: (i, 0, 0, j)),
        compiler_params=pltpu.CompilerParams(
            dimension_semantics=("parallel", "parallel"),
        ),
        cost_estimate=cost,
    )(w_koc, bias2, xs4, xf4)

    x_s_fuse = out.reshape(n, c_s + c_out, t_s, h, w_dim)
    return [x_s_fuse, x_f]


if __name__ == "__main__":
    key = jax.random.PRNGKey(0)

    # Module hyperparameters (SlowFast fusion block).
    dim_in = 4
    fusion_conv_channel_ratio = 2
    fusion_kernel = 5
    alpha = 4
    eps = 1e-5
    c_out = dim_in * fusion_conv_channel_ratio

    # Small example shapes.
    N, C_S, T_S, H, W = 2, 16, 4, 8, 8
    T_F = T_S * alpha

    k1, k2, k3, k4, k5 = jax.random.split(key, 5)
    x_s = jax.random.normal(k1, (N, C_S, T_S, H, W), jnp.float32)
    x_f = jax.random.normal(k2, (N, dim_in, T_F, H, W), jnp.float32)
    conv_w = 0.1 * jax.random.normal(
        k3, (c_out, dim_in, fusion_kernel, 1, 1), jnp.float32
    )
    gamma = 1.0 + 0.1 * jax.random.normal(k4, (c_out,), jnp.float32)
    beta = 0.1 * jax.random.normal(k5, (c_out,), jnp.float32)
    running_mean = jnp.zeros((c_out,), jnp.float32)
    running_var = jnp.ones((c_out,), jnp.float32)

    x_s_fuse, x_f_out = fuse_fast_to_slow(
        x_s, x_f, conv_w, gamma, beta, running_mean, running_var,
        alpha=alpha, fusion_kernel=fusion_kernel, eps=eps,
    )
    jax.block_until_ready(x_s_fuse)

    # Pure-JAX reference for correctness.
    pad = fusion_kernel // 2
    fuse_ref = jax.lax.conv_general_dilated(
        x_f, conv_w, window_strides=(alpha, 1, 1),
        padding=((pad, pad), (0, 0), (0, 0)),
        dimension_numbers=("NCDHW", "OIDHW", "NCDHW"),
    )
    inv_std = 1.0 / jnp.sqrt(running_var + eps)
    scale_ref = (gamma * inv_std)[None, :, None, None, None]
    bias_ref = (beta - running_mean * gamma * inv_std)[None, :, None, None, None]
    fuse_ref = jnp.maximum(fuse_ref * scale_ref + bias_ref, 0.0)
    ref = jnp.concatenate([x_s, fuse_ref], axis=1)

    assert x_s_fuse.shape == (N, C_S + c_out, T_S, H, W), x_s_fuse.shape
    assert jnp.allclose(x_s_fuse, ref, atol=1e-4, rtol=1e-4), "mismatch vs reference"
    assert jnp.allclose(x_f_out, x_f), "fast pathway must pass through unchanged"
    print("KERNEL_OK")
</pallas_src>

<mosaic_0001>
module attributes {stable_mosaic.version = 11 : i64} {
  func.func @_fuse_concat_kernel(%arg0: i32, %arg1: i32, %arg2: memref<5x8x4xf32, #tpu.memory_space<vmem>>, %arg3: memref<8x1xf32, #tpu.memory_space<vmem>>, %arg4: memref<1x16x4x64xf32, #tpu.memory_space<vmem>>, %arg5: memref<1x4x16x64xf32, #tpu.memory_space<vmem>>, %arg6: memref<1x24x4x64xf32, #tpu.memory_space<vmem>>) attributes {dimension_semantics = [#tpu.dimension_semantics<parallel>, #tpu.dimension_semantics<parallel>], iteration_bounds = array<i64: 2, 1>, scalar_prefetch = 0 : i64, scratch_operands = 0 : i64, tpu.core_type = #tpu.core_type<tc>, window_params = [{pipeline_mode = #tpu.pipeline_mode<synchronous>, transform_indices = @transform_0, window_bounds = array<i64: 5, 8, 4>}, {pipeline_mode = #tpu.pipeline_mode<synchronous>, transform_indices = @transform_1, window_bounds = array<i64: 8, 1>}, {transform_indices = @transform_2, window_bounds = array<i64: 1, 16, 4, 64>}, {transform_indices = @transform_3, window_bounds = array<i64: 1, 4, 16, 64>}, {transform_indices = @transform_4, window_bounds = array<i64: 1, 24, 4, 64>}]} {
    %c0 = arith.constant 0 : index
    %c0_0 = arith.constant 0 : index
    %c0_1 = arith.constant 0 : index
    %c0_2 = arith.constant 0 : index
    %0 = vector.load %arg4[%c0, %c0_0, %c0_1, %c0_2] : memref<1x16x4x64xf32, #tpu.memory_space<vmem>>, vector<1x16x4x64xf32>
    %1 = vector.shape_cast %0 : vector<1x16x4x64xf32> to vector<16x4x64xf32>
    %c0_3 = arith.constant 0 : index
    %c0_4 = arith.constant 0 : index
    %c0_5 = arith.constant 0 : index
    %c0_6 = arith.constant 0 : index
    %2 = vector.load %arg6[%c0_3, %c0_4, %c0_5, %c0_6] : memref<1x24x4x64xf32, #tpu.memory_space<vmem>>, vector<1x16x4x64xf32>
    %3 = vector.shape_cast %2 : vector<1x16x4x64xf32> to vector<16x4x64xf32>
    %4 = vector.shape_cast %1 : vector<16x4x64xf32> to vector<1x16x4x64xf32>
    tpu.vector_store %arg6[%c0_3, %c0_4, %c0_5, %c0_6], %4 {strides = array<i32>} : memref<1x24x4x64xf32, #tpu.memory_space<vmem>>, vector<1x16x4x64xf32>,
    %c0_7 = arith.constant 0 : index
    %c0_8 = arith.constant 0 : index
    %5 = vector.load %arg3[%c0_7, %c0_8] : memref<8x1xf32, #tpu.memory_space<vmem>>, vector<8x1xf32>
    %c2 = arith.constant 2 : index
    %c0_9 = arith.constant 0 : index
    %c0_10 = arith.constant 0 : index
    %6 = vector.load %arg2[%c2, %c0_9, %c0_10] : memref<5x8x4xf32, #tpu.memory_space<vmem>>, vector<1x8x4xf32>
    %7 = vector.shape_cast %6 : vector<1x8x4xf32> to vector<8x4xf32>
    %c0_11 = arith.constant 0 : index
    %c0_12 = arith.constant 0 : index
    %c0_13 = arith.constant 0 : index
    %c0_14 = arith.constant 0 : index
    %8 = vector.load %arg5[%c0_11, %c0_12, %c0_13, %c0_14] : memref<1x4x16x64xf32, #tpu.memory_space<vmem>>, vector<1x4x1x64xf32>
    %9 = vector.shape_cast %8 : vector<1x4x1x64xf32> to vector<4x64xf32>
    %cst = arith.constant dense<0.000000e+00> : vector<8x64xf32>
    %10 = tpu.matmul %7, %9, %cst {dimension_numbers = #tpu.dot_dimension_numbers<[1], [0], [0], [1], [0, 0, 1, 1], [], []>} : vector<8x4xf32>, vector<4x64xf32>, vector<8x64xf32> -> vector<8x64xf32>
    %c3 = arith.constant 3 : index
    %c0_15 = arith.constant 0 : index
    %c0_16 = arith.constant 0 : index
    %11 = vector.load %arg2[%c3, %c0_15, %c0_16] : memref<5x8x4xf32, #tpu.memory_space<vmem>>, vector<1x8x4xf32>
    %12 = vector.shape_cast %11 : vector<1x8x4xf32> to vector<8x4xf32>
    %c0_17 = arith.constant 0 : index
    %c0_18 = arith.constant 0 : index
    %c1 = arith.constant 1 : index
    %c0_19 = arith.constant 0 : index
    %13 = vector.load %arg5[%c0_17, %c0_18, %c1, %c0_19] : memref<1x4x16x64xf32, #tpu.memory_space<vmem>>, vector<1x4x1x64xf32>
    %14 = vector.shape_cast %13 : vector<1x4x1x64xf32> to vector<4x64xf32>
    %cst_20 = arith.constant dense<0.000000e+00> : vector<8x64xf32>
    %15 = tpu.matmul %12, %14, %cst_20 {dimension_numbers = #tpu.dot_dimension_numbers<[1], [0], [0], [1], [0, 0, 1, 1], [], []>} : vector<8x4xf32>, vector<4x64xf32>, vector<8x64xf32> -> vector<8x64xf32>
    %16 = arith.addf %10, %15 : vector<8x64xf32>
    %c4 = arith.constant 4 : index
    %c0_21 = arith.constant 0 : index
    %c0_22 = arith.constant 0 : index
    %17 = vector.load %arg2[%c4, %c0_21, %c0_22] : memref<5x8x4xf32, #tpu.memory_space<vmem>>, vector<1x8x4xf32>
    %18 = vector.shape_cast %17 : vector<1x8x4xf32> to vector<8x4xf32>
    %c0_23 = arith.constant 0 : index
    %c0_24 = arith.constant 0 : index
    %c2_25 = arith.constant 2 : index
    %c0_26 = arith.constant 0 : index
    %19 = vector.load %arg5[%c0_23, %c0_24, %c2_25, %c0_26] : memref<1x4x16x64xf32, #tpu.memory_space<vmem>>, vector<1x4x1x64xf32>
    %20 = vector.shape_cast %19 : vector<1x4x1x64xf32> to vector<4x64xf32>
    %cst_27 = arith.constant dense<0.000000e+00> : vector<8x64xf32>
    %21 = tpu.matmul %18, %20, %cst_27 {dimension_numbers = #tpu.dot_dimension_numbers<[1], [0], [0], [1], [0, 0, 1, 1], [], []>} : vector<8x4xf32>, vector<4x64xf32>, vector<8x64xf32> -> vector<8x64xf32>
    %22 = arith.addf %16, %21 : vector<8x64xf32>
    %23 = vector.broadcast %5 : vector<8x1xf32> to vector<8x64xf32>
    %24 = arith.addf %22, %23 : vector<8x64xf32>
    %cst_28 = arith.constant 0.000000e+00 : f32
    %25 = vector.broadcast %cst_28 : f32 to vector<8x64xf32>
    %26 = arith.maximumf %24, %25 : vector<8x64xf32>
    %c0_29 = arith.constant 0 : index
    %c16 = arith.constant 16 : index
    %c0_30 = arith.constant 0 : index
    %c0_31 = arith.constant 0 : index
    %27 = vector.load %arg6[%c0_29, %c16, %c0_30, %c0_31] : memref<1x24x4x64xf32, #tpu.memory_space<vmem>>, vector<1x8x1x64xf32>
    %28 = vector.shape_cast %27 : vector<1x8x1x64xf32> to vector<8x64xf32>
    %29 = vector.shape_cast %26 : vector<8x64xf32> to vector<1x8x1x64xf32>
    tpu.vector_store %arg6[%c0_29, %c16, %c0_30, %c0_31], %29 {strides = array<i32>} : memref<1x24x4x64xf32, #tpu.memory_space<vmem>>, vector<1x8x1x64xf32>,
    %c0_32 = arith.constant 0 : index
    %c0_33 = arith.constant 0 : index
    %c0_34 = arith.constant 0 : index
    %30 = vector.load %arg2[%c0_32, %c0_33, %c0_34] : memref<5x8x4xf32, #tpu.memory_space<vmem>>, vector<1x8x4xf32>
    %31 = vector.shape_cast %30 : vector<1x8x4xf32> to vector<8x4xf32>
    %c0_35 = arith.constant 0 : index
    %c0_36 = arith.constant 0 : index
    %c2_37 = arith.constant 2 : index
    %c0_38 = arith.constant 0 : index
    %32 = vector.load %arg5[%c0_35, %c0_36, %c2_37, %c0_38] : memref<1x4x16x64xf32, #tpu.memory_space<vmem>>, vector<1x4x1x64xf32>
    %33 = vector.shape_cast %32 : vector<1x4x1x64xf32> to vector<4x64xf32>
    %cst_39 = arith.constant dense<0.000000e+00> : vector<8x64xf32>
    %34 = tpu.matmul %31, %33, %cst_39 {dimension_numbers = #tpu.dot_dimension_numbers<[1], [0], [0], [1], [0, 0, 1, 1], [], []>} : vector<8x4xf32>, vector<4x64xf32>, vector<8x64xf32> -> vector<8x64xf32>
    %c1_40 = arith.constant 1 : index
    %c0_41 = arith.constant 0 : index
    %c0_42 = arith.constant 0 : index
    %35 = vector.load %arg2[%c1_40, %c0_41, %c0_42] : memref<5x8x4xf32, #tpu.memory_space<vmem>>, vector<1x8x4xf32>
    %36 = vector.shape_cast %35 : vector<1x8x4xf32> to vector<8x4xf32>
    %c0_43 = arith.constant 0 : index
    %c0_44 = arith.constant 0 : index
    %c3_45 = arith.constant 3 : index
    %c0_46 = arith.constant 0 : index
    %37 = vector.load %arg5[%c0_43, %c0_44, %c3_45, %c0_46] : memref<1x4x16x64xf32, #tpu.memory_space<vmem>>, vector<1x4x1x64xf32>
    %38 = vector.shape_cast %37 : vector<1x4x1x64xf32> to vector<4x64xf32>
    %cst_47 = arith.constant dense<0.000000e+00> : vector<8x64xf32>
    %39 = tpu.matmul %36, %38, %cst_47 {dimension_numbers = #tpu.dot_dimension_numbers<[1], [0], [0], [1], [0, 0, 1, 1], [], []>} : vector<8x4xf32>, vector<4x64xf32>, vector<8x64xf32> -> vector<8x64xf32>
    %40 = arith.addf %34, %39 : vector<8x64xf32>
    %c2_48 = arith.constant 2 : index
    %c0_49 = arith.constant 0 : index
    %c0_50 = arith.constant 0 : index
    %41 = vector.load %arg2[%c2_48, %c0_49, %c0_50] : memref<5x8x4xf32, #tpu.memory_space<vmem>>, vector<1x8x4xf32>
    %42 = vector.shape_cast %41 : vector<1x8x4xf32> to vector<8x4xf32>
    %c0_51 = arith.constant 0 : index
    %c0_52 = arith.constant 0 : index
    %c4_53 = arith.constant 4 : index
    %c0_54 = arith.constant 0 : index
    %43 = vector.load %arg5[%c0_51, %c0_52, %c4_53, %c0_54] : memref<1x4x16x64xf32, #tpu.memory_space<vmem>>, vector<1x4x1x64xf32>
    %44 = vector.shape_cast %43 : vector<1x4x1x64xf32> to vector<4x64xf32>
    %cst_55 = arith.constant dense<0.000000e+00> : vector<8x64xf32>
    %45 = tpu.matmul %42, %44, %cst_55 {dimension_numbers = #tpu.dot_dimension_numbers<[1], [0], [0], [1], [0, 0, 1, 1], [], []>} : vector<8x4xf32>, vector<4x64xf32>, vector<8x64xf32> -> vector<8x64xf32>
    %46 = arith.addf %40, %45 : vector<8x64xf32>
    %c3_56 = arith.constant 3 : index
    %c0_57 = arith.constant 0 : index
    %c0_58 = arith.constant 0 : index
    %47 = vector.load %arg2[%c3_56, %c0_57, %c0_58] : memref<5x8x4xf32, #tpu.memory_space<vmem>>, vector<1x8x4xf32>
    %48 = vector.shape_cast %47 : vector<1x8x4xf32> to vector<8x4xf32>
    %c0_59 = arith.constant 0 : index
    %c0_60 = arith.constant 0 : index
    %c5 = arith.constant 5 : index
    %c0_61 = arith.constant 0 : index
    %49 = vector.load %arg5[%c0_59, %c0_60, %c5, %c0_61] : memref<1x4x16x64xf32, #tpu.memory_space<vmem>>, vector<1x4x1x64xf32>
    %50 = vector.shape_cast %49 : vector<1x4x1x64xf32> to vector<4x64xf32>
    %cst_62 = arith.constant dense<0.000000e+00> : vector<8x64xf32>
    %51 = tpu.matmul %48, %50, %cst_62 {dimension_numbers = #tpu.dot_dimension_numbers<[1], [0], [0], [1], [0, 0, 1, 1], [], []>} : vector<8x4xf32>, vector<4x64xf32>, vector<8x64xf32> -> vector<8x64xf32>
    %52 = arith.addf %46, %51 : vector<8x64xf32>
    %c4_63 = arith.constant 4 : index
    %c0_64 = arith.constant 0 : index
    %c0_65 = arith.constant 0 : index
    %53 = vector.load %arg2[%c4_63, %c0_64, %c0_65] : memref<5x8x4xf32, #tpu.memory_space<vmem>>, vector<1x8x4xf32>
    %54 = vector.shape_cast %53 : vector<1x8x4xf32> to vector<8x4xf32>
    %c0_66 = arith.constant 0 : index
    %c0_67 = arith.constant 0 : index
    %c6 = arith.constant 6 : index
    %c0_68 = arith.constant 0 : index
    %55 = vector.load %arg5[%c0_66, %c0_67, %c6, %c0_68] : memref<1x4x16x64xf32, #tpu.memory_space<vmem>>, vector<1x4x1x64xf32>
    %56 = vector.shape_cast %55 : vector<1x4x1x64xf32> to vector<4x64xf32>
    %cst_69 = arith.constant dense<0.000000e+00> : vector<8x64xf32>
    %57 = tpu.matmul %54, %56, %cst_69 {dimension_numbers = #tpu.dot_dimension_numbers<[1], [0], [0], [1], [0, 0, 1, 1], [], []>} : vector<8x4xf32>, vector<4x64xf32>, vector<8x64xf32> -> vector<8x64xf32>
    %58 = arith.addf %52, %57 : vector<8x64xf32>
    %59 = vector.broadcast %5 : vector<8x1xf32> to vector<8x64xf32>
    %60 = arith.addf %58, %59 : vector<8x64xf32>
    %cst_70 = arith.constant 0.000000e+00 : f32
    %61 = vector.broadcast %cst_70 : f32 to vector<8x64xf32>
    %62 = arith.maximumf %60, %61 : vector<8x64xf32>
    %c0_71 = arith.constant 0 : index
    %c16_72 = arith.constant 16 : index
    %c1_73 = arith.constant 1 : index
    %c0_74 = arith.constant 0 : index
    %63 = vector.load %arg6[%c0_71, %c16_72, %c1_73, %c0_74] : memref<1x24x4x64xf32, #tpu.memory_space<vmem>>, vector<1x8x1x64xf32>
    %64 = vector.shape_cast %63 : vector<1x8x1x64xf32> to vector<8x64xf32>
    %65 = vector.shape_cast %62 : vector<8x64xf32> to vector<1x8x1x64xf32>
    tpu.vector_store %arg6[%c0_71, %c16_72, %c1_73, %c0_74], %65 {strides = array<i32>} : memref<1x24x4x64xf32, #tpu.memory_space<vmem>>, vector<1x8x1x64xf32>,
    %c0_75 = arith.constant 0 : index
    %c0_76 = arith.constant 0 : index
    %c0_77 = arith.constant 0 : index
    %66 = vector.load %arg2[%c0_75, %c0_76, %c0_77] : memref<5x8x4xf32, #tpu.memory_space<vmem>>, vector<1x8x4xf32>
    %67 = vector.shape_cast %66 : vector<1x8x4xf32> to vector<8x4xf32>
    %c0_78 = arith.constant 0 : index
    %c0_79 = arith.constant 0 : index
    %c6_80 = arith.constant 6 : index
    %c0_81 = arith.constant 0 : index
    %68 = vector.load %arg5[%c0_78, %c0_79, %c6_80, %c0_81] : memref<1x4x16x64xf32, #tpu.memory_space<vmem>>, vector<1x4x1x64xf32>
    %69 = vector.shape_cast %68 : vector<1x4x1x64xf32> to vector<4x64xf32>
    %cst_82 = arith.constant dense<0.000000e+00> : vector<8x64xf32>
    %70 = tpu.matmul %67, %69, %cst_82 {dimension_numbers = #tpu.dot_dimension_numbers<[1], [0], [0], [1], [0, 0, 1, 1], [], []>} : vector<8x4xf32>, vector<4x64xf32>, vector<8x64xf32> -> vector<8x64xf32>
    %c1_83 = arith.constant 1 : index
    %c0_84 = arith.constant 0 : index
    %c0_85 = arith.constant 0 : index
    %71 = vector.load %arg2[%c1_83, %c0_84, %c0_85] : memref<5x8x4xf32, #tpu.memory_space<vmem>>, vector<1x8x4xf32>
    %72 = vector.shape_cast %71 : vector<1x8x4xf32> to vector<8x4xf32>
    %c0_86 = arith.constant 0 : index
    %c0_87 = arith.constant 0 : index
    %c7 = arith.constant 7 : index
    %c0_88 = arith.constant 0 : index
    %73 = vector.load %arg5[%c0_86, %c0_87, %c7, %c0_88] : memref<1x4x16x64xf32, #tpu.memory_space<vmem>>, vector<1x4x1x64xf32>
    %74 = vector.shape_cast %73 : vector<1x4x1x64xf32> to vector<4x64xf32>
    %cst_89 = arith.constant dense<0.000000e+00> : vector<8x64xf32>
    %75 = tpu.matmul %72, %74, %cst_89 {dimension_numbers = #tpu.dot_dimension_numbers<[1], [0], [0], [1], [0, 0, 1, 1], [], []>} : vector<8x4xf32>, vector<4x64xf32>, vector<8x64xf32> -> vector<8x64xf32>
    %76 = arith.addf %70, %75 : vector<8x64xf32>
    %c2_90 = arith.constant 2 : index
    %c0_91 = arith.constant 0 : index
    %c0_92 = arith.constant 0 : index
    %77 = vector.load %arg2[%c2_90, %c0_91, %c0_92] : memref<5x8x4xf32, #tpu.memory_space<vmem>>, vector<1x8x4xf32>
    %78 = vector.shape_cast %77 : vector<1x8x4xf32> to vector<8x4xf32>
    %c0_93 = arith.constant 0 : index
    %c0_94 = arith.constant 0 : index
    %c8 = arith.constant 8 : index
    %c0_95 = arith.constant 0 : index
    %79 = vector.load %arg5[%c0_93, %c0_94, %c8, %c0_95] : memref<1x4x16x64xf32, #tpu.memory_space<vmem>>, vector<1x4x1x64xf32>
    %80 = vector.shape_cast %79 : vector<1x4x1x64xf32> to vector<4x64xf32>
    %cst_96 = arith.constant dense<0.000000e+00> : vector<8x64xf32>
    %81 = tpu.matmul %78, %80, %cst_96 {dimension_numbers = #tpu.dot_dimension_numbers<[1], [0], [0], [1], [0, 0, 1, 1], [], []>} : vector<8x4xf32>, vector<4x64xf32>, vector<8x64xf32> -> vector<8x64xf32>
    %82 = arith.addf %76, %81 : vector<8x64xf32>
    %c3_97 = arith.constant 3 : index
    %c0_98 = arith.constant 0 : index
    %c0_99 = arith.constant 0 : index
    %83 = vector.load %arg2[%c3_97, %c0_98, %c0_99] : memref<5x8x4xf32, #tpu.memory_space<vmem>>, vector<1x8x4xf32>
    %84 = vector.shape_cast %83 : vector<1x8x4xf32> to vector<8x4xf32>
    %c0_100 = arith.constant 0 : index
    %c0_101 = arith.constant 0 : index
    %c9 = arith.constant 9 : index
    %c0_102 = arith.constant 0 : index
    %85 = vector.load %arg5[%c0_100, %c0_101, %c9, %c0_102] : memref<1x4x16x64xf32, #tpu.memory_space<vmem>>, vector<1x4x1x64xf32>
    %86 = vector.shape_cast %85 : vector<1x4x1x64xf32> to vector<4x64xf32>
    %cst_103 = arith.constant dense<0.000000e+00> : vector<8x64xf32>
    %87 = tpu.matmul %84, %86, %cst_103 {dimension_numbers = #tpu.dot_dimension_numbers<[1], [0], [0], [1], [0, 0, 1, 1], [], []>} : vector<8x4xf32>, vector<4x64xf32>, vector<8x64xf32> -> vector<8x64xf32>
    %88 = arith.addf %82, %87 : vector<8x64xf32>
    %c4_104 = arith.constant 4 : index
    %c0_105 = arith.constant 0 : index
    %c0_106 = arith.constant 0 : index
    %89 = vector.load %arg2[%c4_104, %c0_105, %c0_106] : memref<5x8x4xf32, #tpu.memory_space<vmem>>, vector<1x8x4xf32>
    %90 = vector.shape_cast %89 : vector<1x8x4xf32> to vector<8x4xf32>
    %c0_107 = arith.constant 0 : index
    %c0_108 = arith.constant 0 : index
    %c10 = arith.constant 10 : index
    %c0_109 = arith.constant 0 : index
    %91 = vector.load %arg5[%c0_107, %c0_108, %c10, %c0_109] : memref<1x4x16x64xf32, #tpu.memory_space<vmem>>, vector<1x4x1x64xf32>
    %92 = vector.shape_cast %91 : vector<1x4x1x64xf32> to vector<4x64xf32>
    %cst_110 = arith.constant dense<0.000000e+00> : vector<8x64xf32>
    %93 = tpu.matmul %90, %92, %cst_110 {dimension_numbers = #tpu.dot_dimension_numbers<[1], [0], [0], [1], [0, 0, 1, 1], [], []>} : vector<8x4xf32>, vector<4x64xf32>, vector<8x64xf32> -> vector<8x64xf32>
    %94 = arith.addf %88, %93 : vector<8x64xf32>
    %95 = vector.broadcast %5 : vector<8x1xf32> to vector<8x64xf32>
    %96 = arith.addf %94, %95 : vector<8x64xf32>
    %cst_111 = arith.constant 0.000000e+00 : f32
    %97 = vector.broadcast %cst_111 : f32 to vector<8x64xf32>
    %98 = arith.maximumf %96, %97 : vector<8x64xf32>
    %c0_112 = arith.constant 0 : index
    %c16_113 = arith.constant 16 : index
    %c2_114 = arith.constant 2 : index
    %c0_115 = arith.constant 0 : index
    %99 = vector.load %arg6[%c0_112, %c16_113, %c2_114, %c0_115] : memref<1x24x4x64xf32, #tpu.memory_space<vmem>>, vector<1x8x1x64xf32>
    %100 = vector.shape_cast %99 : vector<1x8x1x64xf32> to vector<8x64xf32>
    %101 = vector.shape_cast %98 : vector<8x64xf32> to vector<1x8x1x64xf32>
    tpu.vector_store %arg6[%c0_112, %c16_113, %c2_114, %c0_115], %101 {strides = array<i32>} : memref<1x24x4x64xf32, #tpu.memory_space<vmem>>, vector<1x8x1x64xf32>,
    %c0_116 = arith.constant 0 : index
    %c0_117 = arith.constant 0 : index
    %c0_118 = arith.constant 0 : index
    %102 = vector.load %arg2[%c0_116, %c0_117, %c0_118] : memref<5x8x4xf32, #tpu.memory_space<vmem>>, vector<1x8x4xf32>
    %103 = vector.shape_cast %102 : vector<1x8x4xf32> to vector<8x4xf32>
    %c0_119 = arith.constant 0 : index
    %c0_120 = arith.constant 0 : index
    %c10_121 = arith.constant 10 : index
    %c0_122 = arith.constant 0 : index
    %104 = vector.load %arg5[%c0_119, %c0_120, %c10_121, %c0_122] : memref<1x4x16x64xf32, #tpu.memory_space<vmem>>, vector<1x4x1x64xf32>
    %105 = vector.shape_cast %104 : vector<1x4x1x64xf32> to vector<4x64xf32>
    %cst_123 = arith.constant dense<0.000000e+00> : vector<8x64xf32>
    %106 = tpu.matmul %103, %105, %cst_123 {dimension_numbers = #tpu.dot_dimension_numbers<[1], [0], [0], [1], [0, 0, 1, 1], [], []>} : vector<8x4xf32>, vector<4x64xf32>, vector<8x64xf32> -> vector<8x64xf32>
    %c1_124 = arith.constant 1 : index
    %c0_125 = arith.constant 0 : index
    %c0_126 = arith.constant 0 : index
    %107 = vector.load %arg2[%c1_124, %c0_125, %c0_126] : memref<5x8x4xf32, #tpu.memory_space<vmem>>, vector<1x8x4xf32>
    %108 = vector.shape_cast %107 : vector<1x8x4xf32> to vector<8x4xf32>
    %c0_127 = arith.constant 0 : index
    %c0_128 = arith.constant 0 : index
    %c11 = arith.constant 11 : index
    %c0_129 = arith.constant 0 : index
    %109 = vector.load %arg5[%c0_127, %c0_128, %c11, %c0_129] : memref<1x4x16x64xf32, #tpu.memory_space<vmem>>, vector<1x4x1x64xf32>
    %110 = vector.shape_cast %109 : vector<1x4x1x64xf32> to vector<4x64xf32>
    %cst_130 = arith.constant dense<0.000000e+00> : vector<8x64xf32>
    %111 = tpu.matmul %108, %110, %cst_130 {dimension_numbers = #tpu.dot_dimension_numbers<[1], [0], [0], [1], [0, 0, 1, 1], [], []>} : vector<8x4xf32>, vector<4x64xf32>, vector<8x64xf32> -> vector<8x64xf32>
    %112 = arith.addf %106, %111 : vector<8x64xf32>
    %c2_131 = arith.constant 2 : index
    %c0_132 = arith.constant 0 : index
    %c0_133 = arith.constant 0 : index
    %113 = vector.load %arg2[%c2_131, %c0_132, %c0_133] : memref<5x8x4xf32, #tpu.memory_space<vmem>>, vector<1x8x4xf32>
    %114 = vector.shape_cast %113 : vector<1x8x4xf32> to vector<8x4xf32>
    %c0_134 = arith.constant 0 : index
    %c0_135 = arith.constant 0 : index
    %c12 = arith.constant 12 : index
    %c0_136 = arith.constant 0 : index
    %115 = vector.load %arg5[%c0_134, %c0_135, %c12, %c0_136] : memref<1x4x16x64xf32, #tpu.memory_space<vmem>>, vector<1x4x1x64xf32>
    %116 = vector.shape_cast %115 : vector<1x4x1x64xf32> to vector<4x64xf32>
    %cst_137 = arith.constant dense<0.000000e+00> : vector<8x64xf32>
    %117 = tpu.matmul %114, %116, %cst_137 {dimension_numbers = #tpu.dot_dimension_numbers<[1], [0], [0], [1], [0, 0, 1, 1], [], []>} : vector<8x4xf32>, vector<4x64xf32>, vector<8x64xf32> -> vector<8x64xf32>
    %118 = arith.addf %112, %117 : vector<8x64xf32>
    %c3_138 = arith.constant 3 : index
    %c0_139 = arith.constant 0 : index
    %c0_140 = arith.constant 0 : index
    %119 = vector.load %arg2[%c3_138, %c0_139, %c0_140] : memref<5x8x4xf32, #tpu.memory_space<vmem>>, vector<1x8x4xf32>
    %120 = vector.shape_cast %119 : vector<1x8x4xf32> to vector<8x4xf32>
    %c0_141 = arith.constant 0 : index
    %c0_142 = arith.constant 0 : index
    %c13 = arith.constant 13 : index
    %c0_143 = arith.constant 0 : index
    %121 = vector.load %arg5[%c0_141, %c0_142, %c13, %c0_143] : memref<1x4x16x64xf32, #tpu.memory_space<vmem>>, vector<1x4x1x64xf32>
    %122 = vector.shape_cast %121 : vector<1x4x1x64xf32> to vector<4x64xf32>
    %cst_144 = arith.constant dense<0.000000e+00> : vector<8x64xf32>
    %123 = tpu.matmul %120, %122, %cst_144 {dimension_numbers = #tpu.dot_dimension_numbers<[1], [0], [0], [1], [0, 0, 1, 1], [], []>} : vector<8x4xf32>, vector<4x64xf32>, vector<8x64xf32> -> vector<8x64xf32>
    %124 = arith.addf %118, %123 : vector<8x64xf32>
    %c4_145 = arith.constant 4 : index
    %c0_146 = arith.constant 0 : index
    %c0_147 = arith.constant 0 : index
    %125 = vector.load %arg2[%c4_145, %c0_146, %c0_147] : memref<5x8x4xf32, #tpu.memory_space<vmem>>, vector<1x8x4xf32>
    %126 = vector.shape_cast %125 : vector<1x8x4xf32> to vector<8x4xf32>
    %c0_148 = arith.constant 0 : index
    %c0_149 = arith.constant 0 : index
    %c14 = arith.constant 14 : index
    %c0_150 = arith.constant 0 : index
    %127 = vector.load %arg5[%c0_148, %c0_149, %c14, %c0_150] : memref<1x4x16x64xf32, #tpu.memory_space<vmem>>, vector<1x4x1x64xf32>
    %128 = vector.shape_cast %127 : vector<1x4x1x64xf32> to vector<4x64xf32>
    %cst_151 = arith.constant dense<0.000000e+00> : vector<8x64xf32>
    %129 = tpu.matmul %126, %128, %cst_151 {dimension_numbers = #tpu.dot_dimension_numbers<[1], [0], [0], [1], [0, 0, 1, 1], [], []>} : vector<8x4xf32>, vector<4x64xf32>, vector<8x64xf32> -> vector<8x64xf32>
    %130 = arith.addf %124, %129 : vector<8x64xf32>
    %131 = vector.broadcast %5 : vector<8x1xf32> to vector<8x64xf32>
    %132 = arith.addf %130, %131 : vector<8x64xf32>
    %cst_152 = arith.constant 0.000000e+00 : f32
    %133 = vector.broadcast %cst_152 : f32 to vector<8x64xf32>
    %134 = arith.maximumf %132, %133 : vector<8x64xf32>
    %c0_153 = arith.constant 0 : index
    %c16_154 = arith.constant 16 : index
    %c3_155 = arith.constant 3 : index
    %c0_156 = arith.constant 0 : index
    %135 = vector.load %arg6[%c0_153, %c16_154, %c3_155, %c0_156] : memref<1x24x4x64xf32, #tpu.memory_space<vmem>>, vector<1x8x1x64xf32>
    %136 = vector.shape_cast %135 : vector<1x8x1x64xf32> to vector<8x64xf32>
    %137 = vector.shape_cast %134 : vector<8x64xf32> to vector<1x8x1x64xf32>
    tpu.vector_store %arg6[%c0_153, %c16_154, %c3_155, %c0_156], %137 {strides = array<i32>} : memref<1x24x4x64xf32, #tpu.memory_space<vmem>>, vector<1x8x1x64xf32>,
    return
  }
  func.func @transform_0(%arg0: i32, %arg1: i32) -> (i32, i32, i32) {
    %c0_i32 = arith.constant 0 : i32
    %c0_i32_0 = arith.constant 0 : i32
    %c0_i32_1 = arith.constant 0 : i32
    %c0_i32_2 = arith.constant 0 : i32
    return %c0_i32, %c0_i32_0, %c0_i32_1 : i32, i32, i32
  }
  func.func @transform_1(%arg0: i32, %arg1: i32) -> (i32, i32) {
    %c0_i32 = arith.constant 0 : i32
    %c0_i32_0 = arith.constant 0 : i32
    %c0_i32_1 = arith.constant 0 : i32
    return %c0_i32, %c0_i32_0 : i32, i32
  }
  func.func @transform_2(%arg0: i32, %arg1: i32) -> (i32, i32, i32, i32) {
    %c0_i32 = arith.constant 0 : i32
    %c0_i32_0 = arith.constant 0 : i32
    %c0_i32_1 = arith.constant 0 : i32
    return %arg0, %c0_i32, %c0_i32_0, %arg1 : i32, i32, i32, i32
  }
  func.func @transform_3(%arg0: i32, %arg1: i32) -> (i32, i32, i32, i32) {
    %c0_i32 = arith.constant 0 : i32
    %c0_i32_0 = arith.constant 0 : i32
    %c0_i32_1 = arith.constant 0 : i32
    return %arg0, %c0_i32, %c0_i32_0, %arg1 : i32, i32, i32, i32
  }
  func.func @transform_4(%arg0: i32, %arg1: i32) -> (i32, i32, i32, i32) {
    %c0_i32 = arith.constant 0 : i32
    %c0_i32_0 = arith.constant 0 : i32
    %c0_i32_1 = arith.constant 0 : i32
    return %arg0, %c0_i32, %c0_i32_0, %arg1 : i32, i32, i32, i32
  }
}

</mosaic_0001>

<llo_original>
// kernel: tpu_custom_call.1
$region0: #{tpu_custom_call.1}
  #allocation0 [shape = 'u32[]', space=smem, size = 0x4, offset = 0x4, fixed_abs, tag = 'smem constant byte address 0x4 - core index']
  #allocation1 [shape = 'u32[144,128]{1,0:T(1,128)}', space=vmem, size = 0x12000, scoped, tag = 'internal scratch']
  %s0 = inlined_call_operand.vmem [shape: f32[5,8,4], index: 0, kind: input, shape index: {}]
  %s1 = inlined_call_operand.vmem [shape: f32[8,1], index: 1, kind: input, shape index: {}]
  %s2 = inlined_call_operand.hbm [shape: f32[2,16,4,64], index: 2, kind: input, shape index: {}]
  %s3 = inlined_call_operand.hbm [shape: f32[2,4,16,64], index: 3, kind: input, shape index: {}]
  %s4 = inlined_call_operand.hbm [shape: f32[2,24,4,64], index: 4, kind: output, shape index: {}]
  %s5 = sld [smem:[#allocation0]]
  $region57: #{tpu_custom_call.1} parent=0
    _
  %s7 = ssub.s32 1, %s5
  %s8 = scalar_select 0, %s7, %s5
  $region1: #{tpu_custom_call.1} parent=0
    #allocation2 [shape = 'u8[65536]{0}', space=vmem, size = 0x10000, scoped, tag = 'input window, operand 2']
    #allocation3 [shape = 's32[2]{0}', space=sflag, size = 0x8, scoped, tag = 'scoped memory for tpu_custom_call.1']
    #allocation4 [shape = 's32[2]{0}', space=sflag, size = 0x8, scoped, tag = 'scoped memory for tpu_custom_call.1']
    #allocation5 [shape = 'u8[65536]{0}', space=vmem, size = 0x10000, scoped, tag = 'input window, operand 3']
    #allocation6 [shape = 's32[2]{0}', space=sflag, size = 0x8, scoped, tag = 'scoped memory for tpu_custom_call.1']
    #allocation7 [shape = 'u8[98304]{0}', space=vmem, size = 0x18000, scoped, tag = 'output window, operand 0']
    %9 = vsyncpa [#allocation3], 0
    %s10 = scalar_lea.sflag [#allocation3], 1
    %11 = vsyncpa %s10, 0
    %12 = vsyncpa [#allocation6], 0
    %s13 = scalar_lea.sflag [#allocation6], 1
    %14 = vsyncpa %s13, 0
    %15 = vsyncpa [#allocation4], 0
    %s16 = scalar_lea.sflag [#allocation4], 1
    %17 = vsyncpa %s16, 0
    loop: start=0, step=1, limit=4
    $region2: #{tpu_custom_call.1} parent=1 // loop_pre_header
      _
    $region3: #{tpu_custom_call.1} parent=1 // loop_header
      %s19 = sphi 0, %s23
      %p20 = scmp.ge.s32.totalorder %s19, 4
      %s26 = sphi 0, %s38
      %s27 = sphi 0, %s34
      %s28 = sphi 0, %s26
      %s29 = sphi 0, %s27
      %s30 = sphi 0, %s28
      %s31 = sphi 0, %s29
      %s39 = sphi 0, %s39
      %s41 = sphi 0, %s39
      %s42 = sphi 0, %s41
      %s56 = sphi 0, %s42
      %s60 = sphi 0, %s60
      %s62 = sphi 0, %s60
      %s63 = sphi 0, %s62
      %s77 = sphi 0, %s63
      %s85 = sphi 0, %s87
      %s88 = sphi 0, %s85
      %s89 = sphi 0, %s88
      %s105 = sphi 0, %s89
      %s113 = sphi 0, %s115
      %s116 = sphi 0, %s113
      %s117 = sphi 0, %s116
      %s133 = sphi 0, %s117
      %s141 = sphi 0, %s143
      %s144 = sphi 0, %s141
      %s145 = sphi 0, %s144
      %s161 = sphi 0, %s145
    $region4: #{tpu_custom_call.1} parent=1 // loop_header_branch
      %22 = sbr.rel (%p20) target = $region8
    $region5: #{tpu_custom_call.1} parent=1 // loop_body
      %s24 = ssub.s32 %s19, 1
      %s25 = ssub.s32 %s19, 2
      %s32 = sadd.s32 1, %s27
      %p33 = scmp.ge.s32.totalorder %s32, 1
      %s34 = scalar_select %p33, 0, %s32
      %s35 = sadd.s32 1, %s26
      %s36 = scalar_select %p33, %s35, %s26
      %p37 = scmp.ge.s32.totalorder %s36, 2
      %s38 = scalar_select %p37, 0, %s36
      %s40 = sadd.s32 %s39, 1
      %p43 = scmp.eq.s32.totalorder %s19, 1
      %p44 = scmp.ne.s32.totalorder %s39, %s41
      %p45 = scmp.eq.s32.totalorder %s19, 0
      %p46 = por %p44, %p45
      %p47 = scmp.ne.s32.totalorder %s39, %s41
      %p48 = scmp.eq.s32.totalorder %s24, 1
      %p49 = por %p47, %p48
      %p50 = scmp.ne.s32.totalorder %s41, %s42
      %p51 = scmp.eq.s32.totalorder %s24, 0
      %p52 = por %p50, %p51
      %p53 = scmp.ne.s32.totalorder %s41, %s42
      %p54 = scmp.eq.s32.totalorder %s25, 1
      %p55 = por %p53, %p54
      %p57 = scmp.ne.s32.totalorder %s42, %s56
      %p58 = scmp.eq.s32.totalorder %s25, 0
      %p59 = por %p57, %p58
      %s61 = sadd.s32 %s60, 1
      %p64 = scmp.eq.s32.totalorder %s19, 1
      %p65 = scmp.ne.s32.totalorder %s60, %s62
      %p66 = scmp.eq.s32.totalorder %s19, 0
      %p67 = por %p65, %p66
      %p68 = scmp.ne.s32.totalorder %s60, %s62
      %p69 = scmp.eq.s32.totalorder %s24, 1
      %p70 = por %p68, %p69
      %p71 = scmp.ne.s32.totalorder %s62, %s63
      %p72 = scmp.eq.s32.totalorder %s24, 0
      %p73 = por %p71, %p72
      %p74 = scmp.ne.s32.totalorder %s62, %s63
      %p75 = scmp.eq.s32.totalorder %s25, 1
      %p76 = por %p74, %p75
      %p78 = scmp.ne.s32.totalorder %s63, %s77
      %p79 = scmp.eq.s32.totalorder %s25, 0
      %p80 = por %p78, %p79
      %s81 = ssub.s32 %s26, %s38
      %s82 = ssub.s32 %s27, %s34
      %s83 = sor.u32 %s81, %s82
      %p84 = scmp.eq.s32.totalorder %s83, 0
      %s86 = sadd.s32 %s85, 1
      %s87 = scalar_select %p84, %s85, %s86
      %p90 = pneg %p84
      %p91 = scmp.eq.s32.totalorder %s19, 1
      %p92 = por %p90, %p91
      %p93 = scmp.ne.s32.totalorder %s85, %s88
      %p94 = scmp.eq.s32.totalorder %s19, 0
      %p95 = por %p93, %p94
      %p96 = scmp.ne.s32.totalorder %s85, %s88
      %p97 = scmp.eq.s32.totalorder %s24, 1
      %p98 = por %p96, %p97
      %p99 = scmp.ne.s32.totalorder %s88, %s89
      %p100 = scmp.eq.s32.totalorder %s24, 0
      %p101 = por %p99, %p100
      %p102 = scmp.ne.s32.totalorder %s88, %s89
      %p103 = scmp.eq.s32.totalorder %s25, 1
      %p104 = por %p102, %p103
      %p106 = scmp.ne.s32.totalorder %s89, %s105
      %p107 = scmp.eq.s32.totalorder %s25, 0
      %p108 = por %p106, %p107
      %s109 = ssub.s32 %s26, %s38
      %s110 = ssub.s32 %s27, %s34
      %s111 = sor.u32 %s109, %s110
      %p112 = scmp.eq.s32.totalorder %s111, 0
      %s114 = sadd.s32 %s113, 1
      %s115 = scalar_select %p112, %s113, %s114
      %p118 = pneg %p112
      %p119 = scmp.eq.s32.totalorder %s19, 1
      %p120 = por %p118, %p119
      %p121 = scmp.ne.s32.totalorder %s113, %s116
      %p122 = scmp.eq.s32.totalorder %s19, 0
      %p123 = por %p121, %p122
      %p124 = scmp.ne.s32.totalorder %s113, %s116
      %p125 = scmp.eq.s32.totalorder %s24, 1
      %p126 = por %p124, %p125
      %p127 = scmp.ne.s32.totalorder %s116, %s117
      %p128 = scmp.eq.s32.totalorder %s24, 0
      %p129 = por %p127, %p128
      %p130 = scmp.ne.s32.totalorder %s116, %s117
      %p131 = scmp.eq.s32.totalorder %s25, 1
      %p132 = por %p130, %p131
      %p134 = scmp.ne.s32.totalorder %s117, %s133
      %p135 = scmp.eq.s32.totalorder %s25, 0
      %p136 = por %p134, %p135
      %s137 = ssub.s32 %s26, %s38
      %s138 = ssub.s32 %s27, %s34
      %s139 = sor.u32 %s137, %s138
      %p140 = scmp.eq.s32.totalorder %s139, 0
      %s142 = sadd.s32 %s141, 1
      %s143 = scalar_select %p140, %s141, %s142
      %p146 = pneg %p140
      %p147 = scmp.eq.s32.totalorder %s19, 1
      %p148 = por %p146, %p147
      %p149 = scmp.ne.s32.totalorder %s141, %s144
      %p150 = scmp.eq.s32.totalorder %s19, 0
      %p151 = por %p149, %p150
      %p152 = scmp.ne.s32.totalorder %s141, %s144
      %p153 = scmp.eq.s32.totalorder %s24, 1
      %p154 = por %p152, %p153
      %p155 = scmp.ne.s32.totalorder %s144, %s145
      %p156 = scmp.eq.s32.totalorder %s24, 0
      %p157 = por %p155, %p156
      %p158 = scmp.ne.s32.totalorder %s144, %s145
      %p159 = scmp.eq.s32.totalorder %s25, 1
      %p160 = por %p158, %p159
      %p162 = scmp.ne.s32.totalorder %s145, %s161
      %p163 = scmp.eq.s32.totalorder %s25, 0
      %p164 = por %p162, %p163
      %p165 = scmp.le.s32.totalorder 1, %s19
      %p166 = scmp.lt.s32.totalorder %s19, 3
      %p167 = pnand %p165, %p166
      %p168 = pneg %p167
      // Predicated region
      $region9: #{tpu_custom_call.1} parent=5 // pred_check
        _
      $region10: #{tpu_custom_call.1} parent=5 // pred_check_branch
        %170 = sbr.rel (%p167) target = $region12
      $region11: #{tpu_custom_call.1} parent=5 // pred_region
        %s171 = ssub.s32 %s19, 1
        // Predicated region
        $region13: #{tpu_custom_call.1} parent=11 // pred_check
          %p172 = pneg %p52
        $region14: #{tpu_custom_call.1} parent=11 // pred_check_branch
          %174 = sbr.rel (%p172) target = $region16
        $region15: #{tpu_custom_call.1} parent=11 // pred_region
          _
        $region16: #{tpu_custom_call.1} parent=11 // pred_fallthru
          _
        // Predicated region
        $region17: #{tpu_custom_call.1} parent=11 // pred_check
          %p175 = pneg %p73
        $region18: #{tpu_custom_call.1} parent=11 // pred_check_branch
          %177 = sbr.rel (%p175) target = $region20
        $region19: #{tpu_custom_call.1} parent=11 // pred_region
          _
        $region20: #{tpu_custom_call.1} parent=11 // pred_fallthru
          _
      $region12: #{tpu_custom_call.1} parent=5 // pred_fallthru
        _
      %p178 = scmp.lt.s32.totalorder %s19, 2
      // Predicated region
      $region21: #{tpu_custom_call.1} parent=5 // pred_check
        %p179 = pneg %p178
      $region22: #{tpu_custom_call.1} parent=5 // pred_check_branch
        %181 = sbr.rel (%p179) target = $region24
      $region23: #{tpu_custom_call.1} parent=5 // pred_region
        // Predicated region
        $region25: #{tpu_custom_call.1} parent=23 // pred_check
          %p182 = pneg %p95
        $region26: #{tpu_custom_call.1} parent=23 // pred_check_branch
          %184 = sbr.rel (%p182) target = $region28
        $region27: #{tpu_custom_call.1} parent=23 // pred_region
          %s185 = sand.u32 %s85, 1
          %s186 = scalar_lea.sflag [#allocation3], %s185
          %s187 = sand.u32 %s85, 1
          %s188 = smul.addr %s187, 64
          %s189 = scalar_lea.vmem [#allocation2], %s188
          %s191 = ssub.s32 1024, 1024
          %192 = vsyncadd %s186, %s191
          %s193 = smul.addr %s26, 16
          %s194 = sadd.s32 %s27, %s193
          %s195 = smul.addr %s194, 64
          %s196 = scalar_lea.hbm %s2, %s195
          %s197 = sshll.u32 %s189, 4
          %s198 = int_to_ptr.vmem [resolvable:$true] %s197
          %203 = dma.hbm_to_vmem [thread:$0]  %s196, 1024, %s198, %s186, 64, 64, 4
        $region28: #{tpu_custom_call.1} parent=23 // pred_fallthru
          _
        // Predicated region
        $region29: #{tpu_custom_call.1} parent=23 // pred_check
          %p204 = pneg %p123
        $region30: #{tpu_custom_call.1} parent=23 // pred_check_branch
          %206 = sbr.rel (%p204) target = $region32
        $region31: #{tpu_custom_call.1} parent=23 // pred_region
          %s207 = sand.u32 %s113, 1
          %s208 = scalar_lea.sflag [#allocation6], %s207
          %s209 = sand.u32 %s113, 1
          %s210 = smul.addr %s209, 64
          %s211 = scalar_lea.vmem [#allocation5], %s210
          %s213 = ssub.s32 1024, 1024
          %214 = vsyncadd %s208, %s213
          %s215 = smul.addr %s26, 8
          %s216 = sadd.s32 %s27, %s215
          %s217 = smul.addr %s216, 128
          %s218 = scalar_lea.hbm %s3, %s217
          %s219 = sshll.u32 %s211, 4
          %s220 = int_to_ptr.vmem [resolvable:$true] %s219
          %225 = dma.hbm_to_vmem [thread:$0]  %s218, 1024, %s220, %s208, 128, 128, 8
        $region32: #{tpu_custom_call.1} parent=23 // pred_fallthru
          _
      $region24: #{tpu_custom_call.1} parent=5 // pred_fallthru
        _
      %p226 = scmp.le.s32.totalorder 1, %s19
      %p227 = scmp.lt.s32.totalorder %s19, 3
      %p228 = pnand %p226, %p227
      %p229 = pneg %p228
      // Predicated region
      $region33: #{tpu_custom_call.1} parent=5 // pred_check
        _
      $region34: #{tpu_custom_call.1} parent=5 // pred_check_branch
        %231 = sbr.rel (%p228) target = $region36
      $region35: #{tpu_custom_call.1} parent=5 // pred_region
        %s232 = ssub.s32 %s19, 1
        %s233 = sand.u32 %s88, 1
        %s234 = scalar_lea.sflag [#allocation3], %s233
        %s235 = sand.u32 %s88, 1
        %s236 = smul.addr %s235, 64
        %s237 = scalar_lea.vmem [#allocation2], %s236
        // Predicated region
        $region37: #{tpu_custom_call.1} parent=35 // pred_check
          %p238 = pneg %p101
        $region38: #{tpu_custom_call.1} parent=35 // pred_check_branch
          %240 = sbr.rel (%p238) target = $region40
        $region39: #{tpu_custom_call.1} parent=35 // pred_region
          %241 = dma.done %s234, 1024
        $region40: #{tpu_custom_call.1} parent=35 // pred_fallthru
          _
        %s242 = sand.u32 %s116, 1
        %s243 = scalar_lea.sflag [#allocation6], %s242
        %s244 = sand.u32 %s116, 1
        %s245 = smul.addr %s244, 64
        %s246 = scalar_lea.vmem [#allocation5], %s245
        // Predicated region
        $region41: #{tpu_custom_call.1} parent=35 // pred_check
          %p247 = pneg %p129
        $region42: #{tpu_custom_call.1} parent=35 // pred_check_branch
          %249 = sbr.rel (%p247) target = $region44
        $region43: #{tpu_custom_call.1} parent=35 // pred_region
          %250 = dma.done %s243, 1024
        $region44: #{tpu_custom_call.1} parent=35 // pred_fallthru
          _
        %p251 = pneg %p52
        %p252 = pneg %p49
        %p253 = pneg %p73
        %p254 = pneg %p70
        %s255 = sand.u32 %s88, 1
        %s256 = scalar_lea.sflag [#allocation3], %s255
        %s257 = sand.u32 %s88, 1
        %s258 = smul.addr %s257, 64
        %s259 = scalar_lea.vmem [#allocation2], %s258
        %p260 = pneg %p101
        %p261 = pneg %p98
        %s262 = sand.u32 %s116, 1
        %s263 = scalar_lea.sflag [#allocation6], %s262
        %s264 = sand.u32 %s116, 1
        %s265 = smul.addr %s264, 64
        %s266 = scalar_lea.vmem [#allocation5], %s265
        %p267 = pneg %p129
        %p268 = pneg %p126
        %p269 = pneg %p157
        %p270 = pneg %p154
        %s271 = sand.u32 %s144, 1
        %s272 = scalar_lea.sflag [#allocation4], %s271
        %s273 = sand.u32 %s144, 1
        %s274 = smul.addr %s273, 96
        %s275 = scalar_lea.vmem [#allocation7], %s274
        %v276 = vld [vmem:[%s237] sm:$0xf]
        %v277 = vld [vmem:[%s237 + $0x4] sm:$0xf]
        %v278 = vld [vmem:[%s237 + $0x8] sm:$0xf]
        %v279 = vld [vmem:[%s237 + $0xc] sm:$0xf]
        %v280 = vld [vmem:[%s237 + $0x10] sm:$0xf]
        %v281 = vld [vmem:[%s237 + $0x14] sm:$0xf]
        %v282 = vld [vmem:[%s237 + $0x18] sm:$0xf]
        %v283 = vld [vmem:[%s237 + $0x1c] sm:$0xf]
        %v284 = vld [vmem:[%s237 + $0x20] sm:$0xf]
        %v285 = vld [vmem:[%s237 + $0x24] sm:$0xf]
        %v286 = vld [vmem:[%s237 + $0x28] sm:$0xf]
        %v287 = vld [vmem:[%s237 + $0x2c] sm:$0xf]
        %v288 = vld [vmem:[%s237 + $0x30] sm:$0xf]
        %v289 = vld [vmem:[%s237 + $0x34] sm:$0xf]
        %v290 = vld [vmem:[%s237 + $0x38] sm:$0xf]
        %v291 = vld [vmem:[%s237 + $0x3c] sm:$0xf]
        %vm292 = vcmask 519168
        %293 = vst.msk [vmem:[%s275] sm:$0xf] %vm292, %v276
        %294 = vst.msk [vmem:[%s275 + $0x4] sm:$0xf] %vm292, %v277
        %295 = vst.msk [vmem:[%s275 + $0x8] sm:$0xf] %vm292, %v278
        %296 = vst.msk [vmem:[%s275 + $0xc] sm:$0xf] %vm292, %v279
        %297 = vst.msk [vmem:[%s275 + $0x10] sm:$0xf] %vm292, %v280
        %298 = vst.msk [vmem:[%s275 + $0x14] sm:$0xf] %vm292, %v281
        %299 = vst.msk [vmem:[%s275 + $0x18] sm:$0xf] %vm292, %v282
        %300 = vst.msk [vmem:[%s275 + $0x1c] sm:$0xf] %vm292, %v283
        %301 = vst.msk [vmem:[%s275 + $0x20] sm:$0xf] %vm292, %v284
        %302 = vst.msk [vmem:[%s275 + $0x24] sm:$0xf] %vm292, %v285
        %303 = vst.msk [vmem:[%s275 + $0x28] sm:$0xf] %vm292, %v286
        %304 = vst.msk [vmem:[%s275 + $0x2c] sm:$0xf] %vm292, %v287
        %305 = vst.msk [vmem:[%s275 + $0x30] sm:$0xf] %vm292, %v288
        %306 = vst.msk [vmem:[%s275 + $0x34] sm:$0xf] %vm292, %v289
        %307 = vst.msk [vmem:[%s275 + $0x38] sm:$0xf] %vm292, %v290
        %308 = vst.msk [vmem:[%s275 + $0x3c] sm:$0xf] %vm292, %v291
        %v309 = vld [vmem:[%s1] sm:$0xff]
        %s310 = scalar_lea.vmem %s0, 16
        %v311 = vld [vmem:[%s310] sm:$0xff]
        %v312 = vld [vmem:[%s246] sm:$0x1]
        %v313 = vld [vmem:[%s246 + $0x10] sm:$0x1]
        %v314 = vld [vmem:[%s246 + $0x20] sm:$0x1]
        %v315 = vld [vmem:[%s246 + $0x30] sm:$0x1]
        %s316 = scalar_lea.vmem %s0, 24
        %v317 = vld [vmem:[%s316] sm:$0xff]
        %v318 = vld [vmem:[%s246 + $0x1] sm:$0x1]
        %v319 = vld [vmem:[%s246 + $0x11] sm:$0x1]
        %v320 = vld [vmem:[%s246 + $0x21] sm:$0x1]
        %v321 = vld [vmem:[%s246 + $0x31] sm:$0x1]
        %v326 = vrot.slane %v319, 7
        %vm327 = vcmask 1041409
        %v328 = vsel %vm327, %v326, %v318
        %v329 = vrot.slane %v320, 6
        %vm330 = vcmask 1042434
        %v331 = vsel %vm330, %v329, %v328
        %v332 = vrot.slane %v321, 5
        %vm333 = vcmask 1043459
        %v334 = vsel %vm333, %v332, %v331
        %vm335 = vcmask 31744
        %v337 = vsel %vm335, %v317, 0
        %vm339 = vcmask 1043456
        %v340 = vsel %vm339, %v334, 0
        %342 = vmatprep.subr.mxu0 0.0
        %343 = vmatpush1.msra.mxu0 %v340
        %344 = vmatprep.subr.mxu0 0.0
        %345 = vmatpush1.msra.mxu0 0.0
        %346 = vmatprep.subr.mxu0 0.0
        %347 = vmatpush1.msra.mxu0 0.0
        %348 = vmatprep.subr.mxu0 0.0
        %349 = vmatpush1.msra.mxu0 0.0
        %350 = vmatprep.subr.mxu0 0.0
        %351 = vmatpush1.msra.mxu0 0.0
        %352 = vmatprep.subr.mxu0 0.0
        %353 = vmatpush1.msra.mxu0 0.0
        %354 = vmatprep.subr.mxu0 0.0
        %355 = vmatpush1.msra.mxu0 0.0
        %356 = vmatprep.subr.mxu0 0.0
        %357 = vmatpush1.msra.mxu0 0.0
        %358 = vmatprep.subr.mxu0 0.0
        %359 = vmatpush1.msra.mxu0 0.0
        %360 = vmatprep.subr.mxu0 0.0
        %361 = vmatpush1.msra.mxu0 0.0
        %362 = vmatprep.subr.mxu0 0.0
        %363 = vmatpush1.msra.mxu0 0.0
        %364 = vmatprep.subr.mxu0 0.0
        %365 = vmatpush1.msra.mxu0 0.0
        %366 = vmatprep.subr.mxu0 0.0
        %367 = vmatpush1.msra.mxu0 0.0
        %368 = vmatprep.subr.mxu0 0.0
        %369 = vmatpush1.msra.mxu0 0.0
        %370 = vmatprep.subr.mxu0 0.0
        %371 = vmatpush1.msra.mxu0 0.0
        %372 = vmatprep.subr.mxu0 0.0
        %373 = vmatpush1.msra.mxu0 0.0
        %374 = vmatprep.subr.mxu0 0.0
        %375 = vmatpush1.msra.mxu0 0.0
        %376 = vmatprep.subr.mxu0 0.0
        %377 = vmatpush1.msra.mxu0 0.0
        %378 = vmatprep.subr.mxu0 0.0
        %379 = vmatpush1.msra.mxu0 0.0
        %380 = vmatprep.subr.mxu0 0.0
        %381 = vmatpush1.msra.mxu0 0.0
        %382 = vmatprep.subr.mxu0 0.0
        %383 = vmatpush1.msra.mxu0 0.0
        %384 = vmatprep.subr.mxu0 0.0
        %385 = vmatpush1.msra.mxu0 0.0
        %386 = vmatprep.subr.mxu0 0.0
        %387 = vmatpush1.msra.mxu0 0.0
        %388 = vmatprep.subr.mxu0 0.0
        %389 = vmatpush1.msra.mxu0 0.0
        %390 = vmatprep.subr.mxu0 0.0
        %391 = vmatpush1.msra.mxu0 0.0
        %392 = vmatprep.subr.mxu0 0.0
        %393 = vmatpush1.msra.mxu0 0.0
        %394 = vmatprep.subr.mxu0 0.0
        %395 = vmatpush1.msra.mxu0 0.0
        %396 = vmatprep.subr.mxu0 0.0
        %397 = vmatpush1.msra.mxu0 0.0
        %398 = vmatprep.subr.mxu0 0.0
        %399 = vmatpush1.msra.mxu0 0.0
        %400 = vmatprep.subr.mxu0 0.0
        %401 = vmatpush1.msra.mxu0 0.0
        %402 = vmatprep.subr.mxu0 0.0
        %403 = vmatpush1.msra.mxu0 0.0
        %404 = vmatprep.subr.mxu0 0.0
        %405 = vmatpush1.msra.mxu0 0.0
        %406 = vmatprep.mubr.f32.mxu0 0.0
        %407 = vmatmul.mubr.f32.gmra.mrb[0].mxu0 %v337
        %v408 = vpop.f32.mrb[0].mxu0
        %v409 = vadd.f32 0.0, %v408
        %v410 = vpop.f32.mrb[0].mxu0
        %411 = vdwg.mxu0
        %v416 = vrot.slane %v313, 7
        %v417 = vsel %vm327, %v416, %v312
        %v418 = vrot.slane %v314, 6
        %v419 = vsel %vm330, %v418, %v417
        %v420 = vrot.slane %v315, 5
        %v421 = vsel %vm333, %v420, %v419
        %v423 = vsel %vm335, %v311, 0
        %v425 = vsel %vm339, %v421, 0
        %427 = vmatprep.subr.mxu0 0.0
        %428 = vmatpush1.msra.mxu0 %v425
        %429 = vmatprep.subr.mxu0 0.0
        %430 = vmatpush1.msra.mxu0 0.0
        %431 = vmatprep.subr.mxu0 0.0
        %432 = vmatpush1.msra.mxu0 0.0
        %433 = vmatprep.subr.mxu0 0.0
        %434 = vmatpush1.msra.mxu0 0.0
        %435 = vmatprep.subr.mxu0 0.0
        %436 = vmatpush1.msra.mxu0 0.0
        %437 = vmatprep.subr.mxu0 0.0
        %438 = vmatpush1.msra.mxu0 0.0
        %439 = vmatprep.subr.mxu0 0.0
        %440 = vmatpush1.msra.mxu0 0.0
        %441 = vmatprep.subr.mxu0 0.0
        %442 = vmatpush1.msra.mxu0 0.0
        %443 = vmatprep.subr.mxu0 0.0
        %444 = vmatpush1.msra.mxu0 0.0
        %445 = vmatprep.subr.mxu0 0.0
        %446 = vmatpush1.msra.mxu0 0.0
        %447 = vmatprep.subr.mxu0 0.0
        %448 = vmatpush1.msra.mxu0 0.0
        %449 = vmatprep.subr.mxu0 0.0
        %450 = vmatpush1.msra.mxu0 0.0
        %451 = vmatprep.subr.mxu0 0.0
        %452 = vmatpush1.msra.mxu0 0.0
        %453 = vmatprep.subr.mxu0 0.0
        %454 = vmatpush1.msra.mxu0 0.0
        %455 = vmatprep.subr.mxu0 0.0
        %456 = vmatpush1.msra.mxu0 0.0
        %457 = vmatprep.subr.mxu0 0.0
        %458 = vmatpush1.msra.mxu0 0.0
        %459 = vmatprep.subr.mxu0 0.0
        %460 = vmatpush1.msra.mxu0 0.0
        %461 = vmatprep.subr.mxu0 0.0
        %462 = vmatpush1.msra.mxu0 0.0
        %463 = vmatprep.subr.mxu0 0.0
        %464 = vmatpush1.msra.mxu0 0.0
        %465 = vmatprep.subr.mxu0 0.0
        %466 = vmatpush1.msra.mxu0 0.0
        %467 = vmatprep.subr.mxu0 0.0
        %468 = vmatpush1.msra.mxu0 0.0
        %469 = vmatprep.subr.mxu0 0.0
        %470 = vmatpush1.msra.mxu0 0.0
        %471 = vmatprep.subr.mxu0 0.0
        %472 = vmatpush1.msra.mxu0 0.0
        %473 = vmatprep.subr.mxu0 0.0
        %474 = vmatpush1.msra.mxu0 0.0
        %475 = vmatprep.subr.mxu0 0.0
        %476 = vmatpush1.msra.mxu0 0.0
        %477 = vmatprep.subr.mxu0 0.0
        %478 = vmatpush1.msra.mxu0 0.0
        %479 = vmatprep.subr.mxu0 0.0
        %480 = vmatpush1.msra.mxu0 0.0
        %481 = vmatprep.subr.mxu0 0.0
        %482 = vmatpush1.msra.mxu0 0.0
        %483 = vmatprep.subr.mxu0 0.0
        %484 = vmatpush1.msra.mxu0 0.0
        %485 = vmatprep.subr.mxu0 0.0
        %486 = vmatpush1.msra.mxu0 0.0
        %487 = vmatprep.subr.mxu0 0.0
        %488 = vmatpush1.msra.mxu0 0.0
        %489 = vmatprep.subr.mxu0 0.0
        %490 = vmatpush1.msra.mxu0 0.0
        %491 = vmatprep.mubr.f32.mxu0 0.0
        %492 = vmatmul.mubr.f32.gmra.mrb[0].mxu0 %v423
        %v493 = vpop.f32.mrb[0].mxu0
        %v494 = vadd.f32 %v409, %v493
        %v495 = vpop.f32.mrb[0].mxu0
        %496 = vdwg.mxu0
        %s497 = scalar_lea.vmem %s0, 32
        %v498 = vld [vmem:[%s497] sm:$0xff]
        %v499 = vld [vmem:[%s246 + $0x2] sm:$0x1]
        %v500 = vld [vmem:[%s246 + $0x12] sm:$0x1]
        %v501 = vld [vmem:[%s246 + $0x22] sm:$0x1]
        %v502 = vld [vmem:[%s246 + $0x32] sm:$0x1]
        %v507 = vrot.slane %v500, 7
        %v508 = vsel %vm327, %v507, %v499
        %v509 = vrot.slane %v501, 6
        %v510 = vsel %vm330, %v509, %v508
        %v511 = vrot.slane %v502, 5
        %v512 = vsel %vm333, %v511, %v510
        %v514 = vsel %vm335, %v498, 0
        %v516 = vsel %vm339, %v512, 0
        %518 = vmatprep.subr.mxu0 0.0
        %519 = vmatpush1.msra.mxu0 %v516
        %520 = vmatprep.subr.mxu0 0.0
        %521 = vmatpush1.msra.mxu0 0.0
        %522 = vmatprep.subr.mxu0 0.0
        %523 = vmatpush1.msra.mxu0 0.0
        %524 = vmatprep.subr.mxu0 0.0
        %525 = vmatpush1.msra.mxu0 0.0
        %526 = vmatprep.subr.mxu0 0.0
        %527 = vmatpush1.msra.mxu0 0.0
        %528 = vmatprep.subr.mxu0 0.0
        %529 = vmatpush1.msra.mxu0 0.0
        %530 = vmatprep.subr.mxu0 0.0
        %531 = vmatpush1.msra.mxu0 0.0
        %532 = vmatprep.subr.mxu0 0.0
        %533 = vmatpush1.msra.mxu0 0.0
        %534 = vmatprep.subr.mxu0 0.0
        %535 = vmatpush1.msra.mxu0 0.0
        %536 = vmatprep.subr.mxu0 0.0
        %537 = vmatpush1.msra.mxu0 0.0
        %538 = vmatprep.subr.mxu0 0.0
        %539 = vmatpush1.msra.mxu0 0.0
        %540 = vmatprep.subr.mxu0 0.0
        %541 = vmatpush1.msra.mxu0 0.0
        %542 = vmatprep.subr.mxu0 0.0
        %543 = vmatpush1.msra.mxu0 0.0
        %544 = vmatprep.subr.mxu0 0.0
        %545 = vmatpush1.msra.mxu0 0.0
        %546 = vmatprep.subr.mxu0 0.0
        %547 = vmatpush1.msra.mxu0 0.0
        %548 = vmatprep.subr.mxu0 0.0
        %549 = vmatpush1.msra.mxu0 0.0
        %550 = vmatprep.subr.mxu0 0.0
        %551 = vmatpush1.msra.mxu0 0.0
        %552 = vmatprep.subr.mxu0 0.0
        %553 = vmatpush1.msra.mxu0 0.0
        %554 = vmatprep.subr.mxu0 0.0
        %555 = vmatpush1.msra.mxu0 0.0
        %556 = vmatprep.subr.mxu0 0.0
        %557 = vmatpush1.msra.mxu0 0.0
        %558 = vmatprep.subr.mxu0 0.0
        %559 = vmatpush1.msra.mxu0 0.0
        %560 = vmatprep.subr.mxu0 0.0
        %561 = vmatpush1.msra.mxu0 0.0
        %562 = vmatprep.subr.mxu0 0.0
        %563 = vmatpush1.msra.mxu0 0.0
        %564 = vmatprep.subr.mxu0 0.0
        %565 = vmatpush1.msra.mxu0 0.0
        %566 = vmatprep.subr.mxu0 0.0
        %567 = vmatpush1.msra.mxu0 0.0
        %568 = vmatprep.subr.mxu0 0.0
        %569 = vmatpush1.msra.mxu0 0.0
        %570 = vmatprep.subr.mxu0 0.0
        %571 = vmatpush1.msra.mxu0 0.0
        %572 = vmatprep.subr.mxu0 0.0
        %573 = vmatpush1.msra.mxu0 0.0
        %574 = vmatprep.subr.mxu0 0.0
        %575 = vmatpush1.msra.mxu0 0.0
        %576 = vmatprep.subr.mxu0 0.0
        %577 = vmatpush1.msra.mxu0 0.0
        %578 = vmatprep.subr.mxu0 0.0
        %579 = vmatpush1.msra.mxu0 0.0
        %580 = vmatprep.subr.mxu0 0.0
        %581 = vmatpush1.msra.mxu0 0.0
        %582 = vmatprep.mubr.f32.mxu0 0.0
        %583 = vmatmul.mubr.f32.gmra.mrb[0].mxu0 %v514
        %v584 = vpop.f32.mrb[0].mxu0
        %v585 = vadd.f32 0.0, %v584
        %v586 = vpop.f32.mrb[0].mxu0
        %587 = vdwg.mxu0
        %v588 = vadd.f32 %v494, %v585
        %590 = vset.pattern.permute.xlu0 0
        %591 = vperm.xlu0 %590, %v309
        %v592 = vpop.permute.xlu0 %591
        %v594 = vadd.f32 %v588, %v592
        %v595 = vmax.f32 %v594, 0.0
        %v597 = vcombine.high %v595, %v595
        %v599 = vunpack.c.l.s4 1966171168
        %v600 = vunpack.c.0.s8 %v599
        %v601 = vlaneseq
        %v602 = vshrl.u32 %v601, 7
        %v603 = vsub.s32 %v600, %v602
        %v604 = vrot.slane %v595, %v603
        %v606 = vunpack.c.l.s4 1966171168
        %v607 = vunpack.c.0.s8 %v606
        %v608 = vlaneseq
        %v609 = vshrl.u32 %v608, 7
        %v610 = vsub.s32 %v607, %v609
        %v611 = vrot.slane %v597, %v610
        %v612 = vcombine.high %v604, %v604
        %v613 = vcombine.high %v611, %v611
        %v615 = vunpack.c.l.s4 1966171168
        %v616 = vunpack.c.0.s8 %v615
        %v617 = vlaneseq
        %v618 = vshrl.u32 %v617, 7
        %v619 = vsub.s32 %v616, %v618
        %v620 = vrot.slane %v604, %v619
        %v622 = vunpack.c.l.s4 1966171168
        %v623 = vunpack.c.0.s8 %v622
        %v624 = vlaneseq
        %v625 = vshrl.u32 %v624, 7
        %v626 = vsub.s32 %v623, %v625
        %v627 = vrot.slane %v611, %v626
        %v629 = vunpack.c.l.s4 1966171168
        %v630 = vunpack.c.0.s8 %v629
        %v631 = vlaneseq
        %v632 = vshrl.u32 %v631, 7
        %v633 = vsub.s32 %v630, %v632
        %v634 = vrot.slane %v612, %v633
        %v636 = vunpack.c.l.s4 1966171168
        %v637 = vunpack.c.0.s8 %v636
        %v638 = vlaneseq
        %v639 = vshrl.u32 %v638, 7
        %v640 = vsub.s32 %v637, %v639
        %v641 = vrot.slane %v613, %v640
        %v642 = vcombine.high %v620, %v620
        %v643 = vcombine.high %v627, %v627
        %v644 = vcombine.high %v634, %v634
        %v645 = vcombine.high %v641, %v641
        %s654 = scalar_lea.vmem %s275, 64 [#allocation7]
        %vm655 = vcmask 516096
        %656 = vst.msk [vmem:[%s654] sm:$0x1] %vm655, %v620
        %657 = vst.msk [vmem:[%s654 + $0x4] sm:$0x1] %vm655, %v634
        %658 = vst.msk [vmem:[%s654 + $0x8] sm:$0x1] %vm655, %v642
        %659 = vst.msk [vmem:[%s654 + $0xc] sm:$0x1] %vm655, %v644
        %660 = vst.msk [vmem:[%s654 + $0x10] sm:$0x1] %vm655, %v627
        %661 = vst.msk [vmem:[%s654 + $0x14] sm:$0x1] %vm655, %v641
        %662 = vst.msk [vmem:[%s654 + $0x18] sm:$0x1] %vm655, %v643
        %663 = vst.msk [vmem:[%s654 + $0x1c] sm:$0x1] %vm655, %v645
        %v664 = vld [vmem:[%s0] sm:$0xff]
        %v665 = vld [vmem:[%s246 + $0x2] sm:$0x1]
        %v666 = vld [vmem:[%s246 + $0x12] sm:$0x1]
        %v667 = vld [vmem:[%s246 + $0x22] sm:$0x1]
        %v668 = vld [vmem:[%s246 + $0x32] sm:$0x1]
        %s669 = scalar_lea.vmem %s0, 8
        %v670 = vld [vmem:[%s669] sm:$0xff]
        %v671 = vld [vmem:[%s246 + $0x3] sm:$0x1]
        %v672 = vld [vmem:[%s246 + $0x13] sm:$0x1]
        %v673 = vld [vmem:[%s246 + $0x23] sm:$0x1]
        %v674 = vld [vmem:[%s246 + $0x33] sm:$0x1]
        %v679 = vrot.slane %v672, 7
        %v680 = vsel %vm327, %v679, %v671
        %v681 = vrot.slane %v673, 6
        %v682 = vsel %vm330, %v681, %v680
        %v683 = vrot.slane %v674, 5
        %v684 = vsel %vm333, %v683, %v682
        %v686 = vsel %vm335, %v670, 0
        %v688 = vsel %vm339, %v684, 0
        %690 = vmatprep.subr.mxu0 0.0
        %691 = vmatpush1.msra.mxu0 %v688
        %692 = vmatprep.subr.mxu0 0.0
        %693 = vmatpush1.msra.mxu0 0.0
        %694 = vmatprep.subr.mxu0 0.0
        %695 = vmatpush1.msra.mxu0 0.0
        %696 = vmatprep.subr.mxu0 0.0
        %697 = vmatpush1.msra.mxu0 0.0
        %698 = vmatprep.subr.mxu0 0.0
        %699 = vmatpush1.msra.mxu0 0.0
        %700 = vmatprep.subr.mxu0 0.0
        %701 = vmatpush1.msra.mxu0 0.0
        %702 = vmatprep.subr.mxu0 0.0
        %703 = vmatpush1.msra.mxu0 0.0
        %704 = vmatprep.subr.mxu0 0.0
        %705 = vmatpush1.msra.mxu0 0.0
        %706 = vmatprep.subr.mxu0 0.0
        %707 = vmatpush1.msra.mxu0 0.0
        %708 = vmatprep.subr.mxu0 0.0
        %709 = vmatpush1.msra.mxu0 0.0
        %710 = vmatprep.subr.mxu0 0.0
        %711 = vmatpush1.msra.mxu0 0.0
        %712 = vmatprep.subr.mxu0 0.0
        %713 = vmatpush1.msra.mxu0 0.0
        %714 = vmatprep.subr.mxu0 0.0
        %715 = vmatpush1.msra.mxu0 0.0
        %716 = vmatprep.subr.mxu0 0.0
        %717 = vmatpush1.msra.mxu0 0.0
        %718 = vmatprep.subr.mxu0 0.0
        %719 = vmatpush1.msra.mxu0 0.0
        %720 = vmatprep.subr.mxu0 0.0
        %721 = vmatpush1.msra.mxu0 0.0
        %722 = vmatprep.subr.mxu0 0.0
        %723 = vmatpush1.msra.mxu0 0.0
        %724 = vmatprep.subr.mxu0 0.0
        %725 = vmatpush1.msra.mxu0 0.0
        %726 = vmatprep.subr.mxu0 0.0
        %727 = vmatpush1.msra.mxu0 0.0
        %728 = vmatprep.subr.mxu0 0.0
        %729 = vmatpush1.msra.mxu0 0.0
        %730 = vmatprep.subr.mxu0 0.0
        %731 = vmatpush1.msra.mxu0 0.0
        %732 = vmatprep.subr.mxu0 0.0
        %733 = vmatpush1.msra.mxu0 0.0
        %734 = vmatprep.subr.mxu0 0.0
        %735 = vmatpush1.msra.mxu0 0.0
        %736 = vmatprep.subr.mxu0 0.0
        %737 = vmatpush1.msra.mxu0 0.0
        %738 = vmatprep.subr.mxu0 0.0
        %739 = vmatpush1.msra.mxu0 0.0
        %740 = vmatprep.subr.mxu0 0.0
        %741 = vmatpush1.msra.mxu0 0.0
        %742 = vmatprep.subr.mxu0 0.0
        %743 = vmatpush1.msra.mxu0 0.0
        %744 = vmatprep.subr.mxu0 0.0
        %745 = vmatpush1.msra.mxu0 0.0
        %746 = vmatprep.subr.mxu0 0.0
        %747 = vmatpush1.msra.mxu0 0.0
        %748 = vmatprep.subr.mxu0 0.0
        %749 = vmatpush1.msra.mxu0 0.0
        %750 = vmatprep.subr.mxu0 0.0
        %751 = vmatpush1.msra.mxu0 0.0
        %752 = vmatprep.subr.mxu0 0.0
        %753 = vmatpush1.msra.mxu0 0.0
        %754 = vmatprep.mubr.f32.mxu0 0.0
        %755 = vmatmul.mubr.f32.gmra.mrb[0].mxu0 %v686
        %v756 = vpop.f32.mrb[0].mxu0
        %v757 = vadd.f32 0.0, %v756
        %v758 = vpop.f32.mrb[0].mxu0
        %759 = vdwg.mxu0
        %v764 = vrot.slane %v666, 7
        %v765 = vsel %vm327, %v764, %v665
        %v766 = vrot.slane %v667, 6
        %v767 = vsel %vm330, %v766, %v765
        %v768 = vrot.slane %v668, 5
        %v769 = vsel %vm333, %v768, %v767
        %v771 = vsel %vm335, %v664, 0
        %v773 = vsel %vm339, %v769, 0
        %775 = vmatprep.subr.mxu0 0.0
        %776 = vmatpush1.msra.mxu0 %v773
        %777 = vmatprep.subr.mxu0 0.0
        %778 = vmatpush1.msra.mxu0 0.0
        %779 = vmatprep.subr.mxu0 0.0
        %780 = vmatpush1.msra.mxu0 0.0
        %781 = vmatprep.subr.mxu0 0.0
        %782 = vmatpush1.msra.mxu0 0.0
        %783 = vmatprep.subr.mxu0 0.0
        %784 = vmatpush1.msra.mxu0 0.0
        %785 = vmatprep.subr.mxu0 0.0
        %786 = vmatpush1.msra.mxu0 0.0
        %787 = vmatprep.subr.mxu0 0.0
        %788 = vmatpush1.msra.mxu0 0.0
        %789 = vmatprep.subr.mxu0 0.0
        %790 = vmatpush1.msra.mxu0 0.0
        %791 = vmatprep.subr.mxu0 0.0
        %792 = vmatpush1.msra.mxu0 0.0
        %793 = vmatprep.subr.mxu0 0.0
        %794 = vmatpush1.msra.mxu0 0.0
        %795 = vmatprep.subr.mxu0 0.0
        %796 = vmatpush1.msra.mxu0 0.0
        %797 = vmatprep.subr.mxu0 0.0
        %798 = vmatpush1.msra.mxu0 0.0
        %799 = vmatprep.subr.mxu0 0.0
        %800 = vmatpush1.msra.mxu0 0.0
        %801 = vmatprep.subr.mxu0 0.0
        %802 = vmatpush1.msra.mxu0 0.0
        %803 = vmatprep.subr.mxu0 0.0
        %804 = vmatpush1.msra.mxu0 0.0
        %805 = vmatprep.subr.mxu0 0.0
        %806 = vmatpush1.msra.mxu0 0.0
        %807 = vmatprep.subr.mxu0 0.0
        %808 = vmatpush1.msra.mxu0 0.0
        %809 = vmatprep.subr.mxu0 0.0
        %810 = vmatpush1.msra.mxu0 0.0
        %811 = vmatprep.subr.mxu0 0.0
        %812 = vmatpush1.msra.mxu0 0.0
        %813 = vmatprep.subr.mxu0 0.0
        %814 = vmatpush1.msra.mxu0 0.0
        %815 = vmatprep.subr.mxu0 0.0
        %816 = vmatpush1.msra.mxu0 0.0
        %817 = vmatprep.subr.mxu0 0.0
        %818 = vmatpush1.msra.mxu0 0.0
        %819 = vmatprep.subr.mxu0 0.0
        %820 = vmatpush1.msra.mxu0 0.0
        %821 = vmatprep.subr.mxu0 0.0
        %822 = vmatpush1.msra.mxu0 0.0
        %823 = vmatprep.subr.mxu0 0.0
        %824 = vmatpush1.msra.mxu0 0.0
        %825 = vmatprep.subr.mxu0 0.0
        %826 = vmatpush1.msra.mxu0 0.0
        %827 = vmatprep.subr.mxu0 0.0
        %828 = vmatpush1.msra.mxu0 0.0
        %829 = vmatprep.subr.mxu0 0.0
        %830 = vmatpush1.msra.mxu0 0.0
        %831 = vmatprep.subr.mxu0 0.0
        %832 = vmatpush1.msra.mxu0 0.0
        %833 = vmatprep.subr.mxu0 0.0
        %834 = vmatpush1.msra.mxu0 0.0
        %835 = vmatprep.subr.mxu0 0.0
        %836 = vmatpush1.msra.mxu0 0.0
        %837 = vmatprep.subr.mxu0 0.0
        %838 = vmatpush1.msra.mxu0 0.0
        %839 = vmatprep.mubr.f32.mxu0 0.0
        %840 = vmatmul.mubr.f32.gmra.mrb[0].mxu0 %v771
        %v841 = vpop.f32.mrb[0].mxu0
        %v842 = vadd.f32 %v757, %v841
        %v843 = vpop.f32.mrb[0].mxu0
        %844 = vdwg.mxu0
        %v845 = vld [vmem:[%s310] sm:$0xff]
        %v846 = vld [vmem:[%s246 + $0x4] sm:$0x1]
        %v847 = vld [vmem:[%s246 + $0x14] sm:$0x1]
        %v848 = vld [vmem:[%s246 + $0x24] sm:$0x1]
        %v849 = vld [vmem:[%s246 + $0x34] sm:$0x1]
        %v854 = vrot.slane %v847, 7
        %v855 = vsel %vm327, %v854, %v846
        %v856 = vrot.slane %v848, 6
        %v857 = vsel %vm330, %v856, %v855
        %v858 = vrot.slane %v849, 5
        %v859 = vsel %vm333, %v858, %v857
        %v861 = vsel %vm335, %v845, 0
        %v863 = vsel %vm339, %v859, 0
        %865 = vmatprep.subr.mxu0 0.0
        %866 = vmatpush1.msra.mxu0 %v863
        %867 = vmatprep.subr.mxu0 0.0
        %868 = vmatpush1.msra.mxu0 0.0
        %869 = vmatprep.subr.mxu0 0.0
        %870 = vmatpush1.msra.mxu0 0.0
        %871 = vmatprep.subr.mxu0 0.0
        %872 = vmatpush1.msra.mxu0 0.0
        %873 = vmatprep.subr.mxu0 0.0
        %874 = vmatpush1.msra.mxu0 0.0
        %875 = vmatprep.subr.mxu0 0.0
        %876 = vmatpush1.msra.mxu0 0.0
        %877 = vmatprep.subr.mxu0 0.0
        %878 = vmatpush1.msra.mxu0 0.0
        %879 = vmatprep.subr.mxu0 0.0
        %880 = vmatpush1.msra.mxu0 0.0
        %881 = vmatprep.subr.mxu0 0.0
        %882 = vmatpush1.msra.mxu0 0.0
        %883 = vmatprep.subr.mxu0 0.0
        %884 = vmatpush1.msra.mxu0 0.0
        %885 = vmatprep.subr.mxu0 0.0
        %886 = vmatpush1.msra.mxu0 0.0
        %887 = vmatprep.subr.mxu0 0.0
        %888 = vmatpush1.msra.mxu0 0.0
        %889 = vmatprep.subr.mxu0 0.0
        %890 = vmatpush1.msra.mxu0 0.0
        %891 = vmatprep.subr.mxu0 0.0
        %892 = vmatpush1.msra.mxu0 0.0
        %893 = vmatprep.subr.mxu0 0.0
        %894 = vmatpush1.msra.mxu0 0.0
        %895 = vmatprep.subr.mxu0 0.0
        %896 = vmatpush1.msra.mxu0 0.0
        %897 = vmatprep.subr.mxu0 0.0
        %898 = vmatpush1.msra.mxu0 0.0
        %899 = vmatprep.subr.mxu0 0.0
        %900 = vmatpush1.msra.mxu0 0.0
        %901 = vmatprep.subr.mxu0 0.0
        %902 = vmatpush1.msra.mxu0 0.0
        %903 = vmatprep.subr.mxu0 0.0
        %904 = vmatpush1.msra.mxu0 0.0
        %905 = vmatprep.subr.mxu0 0.0
        %906 = vmatpush1.msra.mxu0 0.0
        %907 = vmatprep.subr.mxu0 0.0
        %908 = vmatpush1.msra.mxu0 0.0
        %909 = vmatprep.subr.mxu0 0.0
        %910 = vmatpush1.msra.mxu0 0.0
        %911 = vmatprep.subr.mxu0 0.0
        %912 = vmatpush1.msra.mxu0 0.0
        %913 = vmatprep.subr.mxu0 0.0
        %914 = vmatpush1.msra.mxu0 0.0
        %915 = vmatprep.subr.mxu0 0.0
        %916 = vmatpush1.msra.mxu0 0.0
        %917 = vmatprep.subr.mxu0 0.0
        %918 = vmatpush1.msra.mxu0 0.0
        %919 = vmatprep.subr.mxu0 0.0
        %920 = vmatpush1.msra.mxu0 0.0
        %921 = vmatprep.subr.mxu0 0.0
        %922 = vmatpush1.msra.mxu0 0.0
        %923 = vmatprep.subr.mxu0 0.0
        %924 = vmatpush1.msra.mxu0 0.0
        %925 = vmatprep.subr.mxu0 0.0
        %926 = vmatpush1.msra.mxu0 0.0
        %927 = vmatprep.subr.mxu0 0.0
        %928 = vmatpush1.msra.mxu0 0.0
        %929 = vmatprep.mubr.f32.mxu0 0.0
        %930 = vmatmul.mubr.f32.gmra.mrb[0].mxu0 %v861
        %v931 = vpop.f32.mrb[0].mxu0
        %v932 = vadd.f32 0.0, %v931
        %v933 = vpop.f32.mrb[0].mxu0
        %934 = vdwg.mxu0
        %v935 = vadd.f32 %v842, %v932
        %v936 = vld [vmem:[%s316] sm:$0xff]
        %v937 = vld [vmem:[%s246 + $0x5] sm:$0x1]
        %v938 = vld [vmem:[%s246 + $0x15] sm:$0x1]
        %v939 = vld [vmem:[%s246 + $0x25] sm:$0x1]
        %v940 = vld [vmem:[%s246 + $0x35] sm:$0x1]
        %v945 = vrot.slane %v938, 7
        %v946 = vsel %vm327, %v945, %v937
        %v947 = vrot.slane %v939, 6
        %v948 = vsel %vm330, %v947, %v946
        %v949 = vrot.slane %v940, 5
        %v950 = vsel %vm333, %v949, %v948
        %v952 = vsel %vm335, %v936, 0
        %v954 = vsel %vm339, %v950, 0
        %956 = vmatprep.subr.mxu0 0.0
        %957 = vmatpush1.msra.mxu0 %v954
        %958 = vmatprep.subr.mxu0 0.0
        %959 = vmatpush1.msra.mxu0 0.0
        %960 = vmatprep.subr.mxu0 0.0
        %961 = vmatpush1.msra.mxu0 0.0
        %962 = vmatprep.subr.mxu0 0.0
        %963 = vmatpush1.msra.mxu0 0.0
        %964 = vmatprep.subr.mxu0 0.0
        %965 = vmatpush1.msra.mxu0 0.0
        %966 = vmatprep.subr.mxu0 0.0
        %967 = vmatpush1.msra.mxu0 0.0
        %968 = vmatprep.subr.mxu0 0.0
        %969 = vmatpush1.msra.mxu0 0.0
        %970 = vmatprep.subr.mxu0 0.0
        %971 = vmatpush1.msra.mxu0 0.0
        %972 = vmatprep.subr.mxu0 0.0
        %973 = vmatpush1.msra.mxu0 0.0
        %974 = vmatprep.subr.mxu0 0.0
        %975 = vmatpush1.msra.mxu0 0.0
        %976 = vmatprep.subr.mxu0 0.0
        %977 = vmatpush1.msra.mxu0 0.0
        %978 = vmatprep.subr.mxu0 0.0
        %979 = vmatpush1.msra.mxu0 0.0
        %980 = vmatprep.subr.mxu0 0.0
        %981 = vmatpush1.msra.mxu0 0.0
        %982 = vmatprep.subr.mxu0 0.0
        %983 = vmatpush1.msra.mxu0 0.0
        %984 = vmatprep.subr.mxu0 0.0
        %985 = vmatpush1.msra.mxu0 0.0
        %986 = vmatprep.subr.mxu0 0.0
        %987 = vmatpush1.msra.mxu0 0.0
        %988 = vmatprep.subr.mxu0 0.0
        %989 = vmatpush1.msra.mxu0 0.0
        %990 = vmatprep.subr.mxu0 0.0
        %991 = vmatpush1.msra.mxu0 0.0
        %992 = vmatprep.subr.mxu0 0.0
        %993 = vmatpush1.msra.mxu0 0.0
        %994 = vmatprep.subr.mxu0 0.0
        %995 = vmatpush1.msra.mxu0 0.0
        %996 = vmatprep.subr.mxu0 0.0
        %997 = vmatpush1.msra.mxu0 0.0
        %998 = vmatprep.subr.mxu0 0.0
        %999 = vmatpush1.msra.mxu0 0.0
        %1000 = vmatprep.subr.mxu0 0.0
        %1001 = vmatpush1.msra.mxu0 0.0
        %1002 = vmatprep.subr.mxu0 0.0
        %1003 = vmatpush1.msra.mxu0 0.0
        %1004 = vmatprep.subr.mxu0 0.0
        %1005 = vmatpush1.msra.mxu0 0.0
        %1006 = vmatprep.subr.mxu0 0.0
        %1007 = vmatpush1.msra.mxu0 0.0
        %1008 = vmatprep.subr.mxu0 0.0
        %1009 = vmatpush1.msra.mxu0 0.0
        %1010 = vmatprep.subr.mxu0 0.0
        %1011 = vmatpush1.msra.mxu0 0.0
        %1012 = vmatprep.subr.mxu0 0.0
        %1013 = vmatpush1.msra.mxu0 0.0
        %1014 = vmatprep.subr.mxu0 0.0
        %1015 = vmatpush1.msra.mxu0 0.0
        %1016 = vmatprep.subr.mxu0 0.0
        %1017 = vmatpush1.msra.mxu0 0.0
        %1018 = vmatprep.subr.mxu0 0.0
        %1019 = vmatpush1.msra.mxu0 0.0
        %1020 = vmatprep.mubr.f32.mxu0 0.0
        %1021 = vmatmul.mubr.f32.gmra.mrb[0].mxu0 %v952
        %v1022 = vpop.f32.mrb[0].mxu0
        %v1023 = vadd.f32 0.0, %v1022
        %v1024 = vpop.f32.mrb[0].mxu0
        %1025 = vdwg.mxu0
        %v1026 = vadd.f32 %v935, %v1023
        %v1027 = vld [vmem:[%s497] sm:$0xff]
        %v1028 = vld [vmem:[%s246 + $0x6] sm:$0x1]
        %v1029 = vld [vmem:[%s246 + $0x16] sm:$0x1]
        %v1030 = vld [vmem:[%s246 + $0x26] sm:$0x1]
        %v1031 = vld [vmem:[%s246 + $0x36] sm:$0x1]
        %v1036 = vrot.slane %v1029, 7
        %v1037 = vsel %vm327, %v1036, %v1028
        %v1038 = vrot.slane %v1030, 6
        %v1039 = vsel %vm330, %v1038, %v1037
        %v1040 = vrot.slane %v1031, 5
        %v1041 = vsel %vm333, %v1040, %v1039
        %v1043 = vsel %vm335, %v1027, 0
        %v1045 = vsel %vm339, %v1041, 0
        %1047 = vmatprep.subr.mxu0 0.0
        %1048 = vmatpush1.msra.mxu0 %v1045
        %1049 = vmatprep.subr.mxu0 0.0
        %1050 = vmatpush1.msra.mxu0 0.0
        %1051 = vmatprep.subr.mxu0 0.0
        %1052 = vmatpush1.msra.mxu0 0.0
        %1053 = vmatprep.subr.mxu0 0.0
        %1054 = vmatpush1.msra.mxu0 0.0
        %1055 = vmatprep.subr.mxu0 0.0
        %1056 = vmatpush1.msra.mxu0 0.0
        %1057 = vmatprep.subr.mxu0 0.0
        %1058 = vmatpush1.msra.mxu0 0.0
        %1059 = vmatprep.subr.mxu0 0.0
        %1060 = vmatpush1.msra.mxu0 0.0
        %1061 = vmatprep.subr.mxu0 0.0
        %1062 = vmatpush1.msra.mxu0 0.0
        %1063 = vmatprep.subr.mxu0 0.0
        %1064 = vmatpush1.msra.mxu0 0.0
        %1065 = vmatprep.subr.mxu0 0.0
        %1066 = vmatpush1.msra.mxu0 0.0
        %1067 = vmatprep.subr.mxu0 0.0
        %1068 = vmatpush1.msra.mxu0 0.0
        %1069 = vmatprep.subr.mxu0 0.0
        %1070 = vmatpush1.msra.mxu0 0.0
        %1071 = vmatprep.subr.mxu0 0.0
        %1072 = vmatpush1.msra.mxu0 0.0
        %1073 = vmatprep.subr.mxu0 0.0
        %1074 = vmatpush1.msra.mxu0 0.0
        %1075 = vmatprep.subr.mxu0 0.0
        %1076 = vmatpush1.msra.mxu0 0.0
        %1077 = vmatprep.subr.mxu0 0.0
        %1078 = vmatpush1.msra.mxu0 0.0
        %1079 = vmatprep.subr.mxu0 0.0
        %1080 = vmatpush1.msra.mxu0 0.0
        %1081 = vmatprep.subr.mxu0 0.0
        %1082 = vmatpush1.msra.mxu0 0.0
        %1083 = vmatprep.subr.mxu0 0.0
        %1084 = vmatpush1.msra.mxu0 0.0
        %1085 = vmatprep.subr.mxu0 0.0
        %1086 = vmatpush1.msra.mxu0 0.0
        %1087 = vmatprep.subr.mxu0 0.0
        %1088 = vmatpush1.msra.mxu0 0.0
        %1089 = vmatprep.subr.mxu0 0.0
        %1090 = vmatpush1.msra.mxu0 0.0
        %1091 = vmatprep.subr.mxu0 0.0
        %1092 = vmatpush1.msra.mxu0 0.0
        %1093 = vmatprep.subr.mxu0 0.0
        %1094 = vmatpush1.msra.mxu0 0.0
        %1095 = vmatprep.subr.mxu0 0.0
        %1096 = vmatpush1.msra.mxu0 0.0
        %1097 = vmatprep.subr.mxu0 0.0
        %1098 = vmatpush1.msra.mxu0 0.0
        %1099 = vmatprep.subr.mxu0 0.0
        %1100 = vmatpush1.msra.mxu0 0.0
        %1101 = vmatprep.subr.mxu0 0.0
        %1102 = vmatpush1.msra.mxu0 0.0
        %1103 = vmatprep.subr.mxu0 0.0
        %1104 = vmatpush1.msra.mxu0 0.0
        %1105 = vmatprep.subr.mxu0 0.0
        %1106 = vmatpush1.msra.mxu0 0.0
        %1107 = vmatprep.subr.mxu0 0.0
        %1108 = vmatpush1.msra.mxu0 0.0
        %1109 = vmatprep.subr.mxu0 0.0
        %1110 = vmatpush1.msra.mxu0 0.0
        %1111 = vmatprep.mubr.f32.mxu0 0.0
        %1112 = vmatmul.mubr.f32.gmra.mrb[0].mxu0 %v1043
        %v1113 = vpop.f32.mrb[0].mxu0
        %v1114 = vadd.f32 0.0, %v1113
        %v1115 = vpop.f32.mrb[0].mxu0
        %1116 = vdwg.mxu0
        %v1117 = vadd.f32 %v1026, %v1114
        %v1118 = vadd.f32 %v1117, %v592
        %v1119 = vmax.f32 %v1118, 0.0
        %v1121 = vcombine.high %v1119, %v1119
        %v1123 = vunpack.c.l.s4 1966171168
        %v1124 = vunpack.c.0.s8 %v1123
        %v1125 = vlaneseq
        %v1126 = vshrl.u32 %v1125, 7
        %v1127 = vsub.s32 %v1124, %v1126
        %v1128 = vrot.slane %v1119, %v1127
        %v1130 = vunpack.c.l.s4 1966171168
        %v1131 = vunpack.c.0.s8 %v1130
        %v1132 = vlaneseq
        %v1133 = vshrl.u32 %v1132, 7
        %v1134 = vsub.s32 %v1131, %v1133
        %v1135 = vrot.slane %v1121, %v1134
        %v1136 = vcombine.high %v1128, %v1128
        %v1137 = vcombine.high %v1135, %v1135
        %v1139 = vunpack.c.l.s4 1966171168
        %v1140 = vunpack.c.0.s8 %v1139
        %v1141 = vlaneseq
        %v1142 = vshrl.u32 %v1141, 7
        %v1143 = vsub.s32 %v1140, %v1142
        %v1144 = vrot.slane %v1128, %v1143
        %v1146 = vunpack.c.l.s4 1966171168
        %v1147 = vunpack.c.0.s8 %v1146
        %v1148 = vlaneseq
        %v1149 = vshrl.u32 %v1148, 7
        %v1150 = vsub.s32 %v1147, %v1149
        %v1151 = vrot.slane %v1135, %v1150
        %v1153 = vunpack.c.l.s4 1966171168
        %v1154 = vunpack.c.0.s8 %v1153
        %v1155 = vlaneseq
        %v1156 = vshrl.u32 %v1155, 7
        %v1157 = vsub.s32 %v1154, %v1156
        %v1158 = vrot.slane %v1136, %v1157
        %v1160 = vunpack.c.l.s4 1966171168
        %v1161 = vunpack.c.0.s8 %v1160
        %v1162 = vlaneseq
        %v1163 = vshrl.u32 %v1162, 7
        %v1164 = vsub.s32 %v1161, %v1163
        %v1165 = vrot.slane %v1137, %v1164
        %v1166 = vcombine.high %v1144, %v1144
        %v1167 = vcombine.high %v1151, %v1151
        %v1168 = vcombine.high %v1158, %v1158
        %v1169 = vcombine.high %v1165, %v1165
        %1178 = vst.msk [vmem:[%s654 + $0x1] sm:$0x1] %vm655, %v1144
        %1179 = vst.msk [vmem:[%s654 + $0x5] sm:$0x1] %vm655, %v1158
        %1180 = vst.msk [vmem:[%s654 + $0x9] sm:$0x1] %vm655, %v1166
        %1181 = vst.msk [vmem:[%s654 + $0xd] sm:$0x1] %vm655, %v1168
        %1182 = vst.msk [vmem:[%s654 + $0x11] sm:$0x1] %vm655, %v1151
        %1183 = vst.msk [vmem:[%s654 + $0x15] sm:$0x1] %vm655, %v1165
        %1184 = vst.msk [vmem:[%s654 + $0x19] sm:$0x1] %vm655, %v1167
        %1185 = vst.msk [vmem:[%s654 + $0x1d] sm:$0x1] %vm655, %v1169
        %v1186 = vld [vmem:[%s0] sm:$0xff]
        %v1187 = vld [vmem:[%s246 + $0x6] sm:$0x1]
        %v1188 = vld [vmem:[%s246 + $0x16] sm:$0x1]
        %v1189 = vld [vmem:[%s246 + $0x26] sm:$0x1]
        %v1190 = vld [vmem:[%s246 + $0x36] sm:$0x1]
        %v1191 = vld [vmem:[%s669] sm:$0xff]
        %v1192 = vld [vmem:[%s246 + $0x7] sm:$0x1]
        %v1193 = vld [vmem:[%s246 + $0x17] sm:$0x1]
        %v1194 = vld [vmem:[%s246 + $0x27] sm:$0x1]
        %v1195 = vld [vmem:[%s246 + $0x37] sm:$0x1]
        %v1200 = vrot.slane %v1193, 7
        %v1201 = vsel %vm327, %v1200, %v1192
        %v1202 = vrot.slane %v1194, 6
        %v1203 = vsel %vm330, %v1202, %v1201
        %v1204 = vrot.slane %v1195, 5
        %v1205 = vsel %vm333, %v1204, %v1203
        %v1207 = vsel %vm335, %v1191, 0
        %v1209 = vsel %vm339, %v1205, 0
        %1211 = vmatprep.subr.mxu0 0.0
        %1212 = vmatpush1.msra.mxu0 %v1209
        %1213 = vmatprep.subr.mxu0 0.0
        %1214 = vmatpush1.msra.mxu0 0.0
        %1215 = vmatprep.subr.mxu0 0.0
        %1216 = vmatpush1.msra.mxu0 0.0
        %1217 = vmatprep.subr.mxu0 0.0
        %1218 = vmatpush1.msra.mxu0 0.0
        %1219 = vmatprep.subr.mxu0 0.0
        %1220 = vmatpush1.msra.mxu0 0.0
        %1221 = vmatprep.subr.mxu0 0.0
        %1222 = vmatpush1.msra.mxu0 0.0
        %1223 = vmatprep.subr.mxu0 0.0
        %1224 = vmatpush1.msra.mxu0 0.0
        %1225 = vmatprep.subr.mxu0 0.0
        %1226 = vmatpush1.msra.mxu0 0.0
        %1227 = vmatprep.subr.mxu0 0.0
        %1228 = vmatpush1.msra.mxu0 0.0
        %1229 = vmatprep.subr.mxu0 0.0
        %1230 = vmatpush1.msra.mxu0 0.0
        %1231 = vmatprep.subr.mxu0 0.0
        %1232 = vmatpush1.msra.mxu0 0.0
        %1233 = vmatprep.subr.mxu0 0.0
        %1234 = vmatpush1.msra.mxu0 0.0
        %1235 = vmatprep.subr.mxu0 0.0
        %1236 = vmatpush1.msra.mxu0 0.0
        %1237 = vmatprep.subr.mxu0 0.0
        %1238 = vmatpush1.msra.mxu0 0.0
        %1239 = vmatprep.subr.mxu0 0.0
        %1240 = vmatpush1.msra.mxu0 0.0
        %1241 = vmatprep.subr.mxu0 0.0
        %1242 = vmatpush1.msra.mxu0 0.0
        %1243 = vmatprep.subr.mxu0 0.0
        %1244 = vmatpush1.msra.mxu0 0.0
        %1245 = vmatprep.subr.mxu0 0.0
        %1246 = vmatpush1.msra.mxu0 0.0
        %1247 = vmatprep.subr.mxu0 0.0
        %1248 = vmatpush1.msra.mxu0 0.0
        %1249 = vmatprep.subr.mxu0 0.0
        %1250 = vmatpush1.msra.mxu0 0.0
        %1251 = vmatprep.subr.mxu0 0.0
        %1252 = vmatpush1.msra.mxu0 0.0
        %1253 = vmatprep.subr.mxu0 0.0
        %1254 = vmatpush1.msra.mxu0 0.0
        %1255 = vmatprep.subr.mxu0 0.0
        %1256 = vmatpush1.msra.mxu0 0.0
        %1257 = vmatprep.subr.mxu0 0.0
        %1258 = vmatpush1.msra.mxu0 0.0
        %1259 = vmatprep.subr.mxu0 0.0
        %1260 = vmatpush1.msra.mxu0 0.0
        %1261 = vmatprep.subr.mxu0 0.0
        %1262 = vmatpush1.msra.mxu0 0.0
        %1263 = vmatprep.subr.mxu0 0.0
        %1264 = vmatpush1.msra.mxu0 0.0
        %1265 = vmatprep.subr.mxu0 0.0
        %1266 = vmatpush1.msra.mxu0 0.0
        %1267 = vmatprep.subr.mxu0 0.0
        %1268 = vmatpush1.msra.mxu0 0.0
        %1269 = vmatprep.subr.mxu0 0.0
        %1270 = vmatpush1.msra.mxu0 0.0
        %1271 = vmatprep.subr.mxu0 0.0
        %1272 = vmatpush1.msra.mxu0 0.0
        %1273 = vmatprep.subr.mxu0 0.0
        %1274 = vmatpush1.msra.mxu0 0.0
        %1275 = vmatprep.mubr.f32.mxu0 0.0
        %1276 = vmatmul.mubr.f32.gmra.mrb[0].mxu0 %v1207
        %v1277 = vpop.f32.mrb[0].mxu0
        %v1278 = vadd.f32 0.0, %v1277
        %v1279 = vpop.f32.mrb[0].mxu0
        %1280 = vdwg.mxu0
        %v1285 = vrot.slane %v1188, 7
        %v1286 = vsel %vm327, %v1285, %v1187
        %v1287 = vrot.slane %v1189, 6
        %v1288 = vsel %vm330, %v1287, %v1286
        %v1289 = vrot.slane %v1190, 5
        %v1290 = vsel %vm333, %v1289, %v1288
        %v1292 = vsel %vm335, %v1186, 0
        %v1294 = vsel %vm339, %v1290, 0
        %1296 = vmatprep.subr.mxu0 0.0
        %1297 = vmatpush1.msra.mxu0 %v1294
        %1298 = vmatprep.subr.mxu0 0.0
        %1299 = vmatpush1.msra.mxu0 0.0
        %1300 = vmatprep.subr.mxu0 0.0
        %1301 = vmatpush1.msra.mxu0 0.0
        %1302 = vmatprep.subr.mxu0 0.0
        %1303 = vmatpush1.msra.mxu0 0.0
        %1304 = vmatprep.subr.mxu0 0.0
        %1305 = vmatpush1.msra.mxu0 0.0
        %1306 = vmatprep.subr.mxu0 0.0
        %1307 = vmatpush1.msra.mxu0 0.0
        %1308 = vmatprep.subr.mxu0 0.0
        %1309 = vmatpush1.msra.mxu0 0.0
        %1310 = vmatprep.subr.mxu0 0.0
        %1311 = vmatpush1.msra.mxu0 0.0
        %1312 = vmatprep.subr.mxu0 0.0
        %1313 = vmatpush1.msra.mxu0 0.0
        %1314 = vmatprep.subr.mxu0 0.0
        %1315 = vmatpush1.msra.mxu0 0.0
        %1316 = vmatprep.subr.mxu0 0.0
        %1317 = vmatpush1.msra.mxu0 0.0
        %1318 = vmatprep.subr.mxu0 0.0
        %1319 = vmatpush1.msra.mxu0 0.0
        %1320 = vmatprep.subr.mxu0 0.0
        %1321 = vmatpush1.msra.mxu0 0.0
        %1322 = vmatprep.subr.mxu0 0.0
        %1323 = vmatpush1.msra.mxu0 0.0
        %1324 = vmatprep.subr.mxu0 0.0
        %1325 = vmatpush1.msra.mxu0 0.0
        %1326 = vmatprep.subr.mxu0 0.0
        %1327 = vmatpush1.msra.mxu0 0.0
        %1328 = vmatprep.subr.mxu0 0.0
        %1329 = vmatpush1.msra.mxu0 0.0
        %1330 = vmatprep.subr.mxu0 0.0
        %1331 = vmatpush1.msra.mxu0 0.0
        %1332 = vmatprep.subr.mxu0 0.0
        %1333 = vmatpush1.msra.mxu0 0.0
        %1334 = vmatprep.subr.mxu0 0.0
        %1335 = vmatpush1.msra.mxu0 0.0
        %1336 = vmatprep.subr.mxu0 0.0
        %1337 = vmatpush1.msra.mxu0 0.0
        %1338 = vmatprep.subr.mxu0 0.0
        %1339 = vmatpush1.msra.mxu0 0.0
        %1340 = vmatprep.subr.mxu0 0.0
        %1341 = vmatpush1.msra.mxu0 0.0
        %1342 = vmatprep.subr.mxu0 0.0
        %1343 = vmatpush1.msra.mxu0 0.0
        %1344 = vmatprep.subr.mxu0 0.0
        %1345 = vmatpush1.msra.mxu0 0.0
        %1346 = vmatprep.subr.mxu0 0.0
        %1347 = vmatpush1.msra.mxu0 0.0
        %1348 = vmatprep.subr.mxu0 0.0
        %1349 = vmatpush1.msra.mxu0 0.0
        %1350 = vmatprep.subr.mxu0 0.0
        %1351 = vmatpush1.msra.mxu0 0.0
        %1352 = vmatprep.subr.mxu0 0.0
        %1353 = vmatpush1.msra.mxu0 0.0
        %1354 = vmatprep.subr.mxu0 0.0
        %1355 = vmatpush1.msra.mxu0 0.0
        %1356 = vmatprep.subr.mxu0 0.0
        %1357 = vmatpush1.msra.mxu0 0.0
        %1358 = vmatprep.subr.mxu0 0.0
        %1359 = vmatpush1.msra.mxu0 0.0
        %1360 = vmatprep.mubr.f32.mxu0 0.0
        %1361 = vmatmul.mubr.f32.gmra.mrb[0].mxu0 %v1292
        %v1362 = vpop.f32.mrb[0].mxu0
        %v1363 = vadd.f32 %v1278, %v1362
        %v1364 = vpop.f32.mrb[0].mxu0
        %1365 = vdwg.mxu0
        %v1366 = vld [vmem:[%s310] sm:$0xff]
        %v1367 = vld [vmem:[%s246 + $0x8] sm:$0x1]
        %v1368 = vld [vmem:[%s246 + $0x18] sm:$0x1]
        %v1369 = vld [vmem:[%s246 + $0x28] sm:$0x1]
        %v1370 = vld [vmem:[%s246 + $0x38] sm:$0x1]
        %v1375 = vrot.slane %v1368, 7
        %v1376 = vsel %vm327, %v1375, %v1367
        %v1377 = vrot.slane %v1369, 6
        %v1378 = vsel %vm330, %v1377, %v1376
        %v1379 = vrot.slane %v1370, 5
        %v1380 = vsel %vm333, %v1379, %v1378
        %v1382 = vsel %vm335, %v1366, 0
        %v1384 = vsel %vm339, %v1380, 0
        %1386 = vmatprep.subr.mxu0 0.0
        %1387 = vmatpush1.msra.mxu0 %v1384
        %1388 = vmatprep.subr.mxu0 0.0
        %1389 = vmatpush1.msra.mxu0 0.0
        %1390 = vmatprep.subr.mxu0 0.0
        %1391 = vmatpush1.msra.mxu0 0.0
        %1392 = vmatprep.subr.mxu0 0.0
        %1393 = vmatpush1.msra.mxu0 0.0
        %1394 = vmatprep.subr.mxu0 0.0
        %1395 = vmatpush1.msra.mxu0 0.0
        %1396 = vmatprep.subr.mxu0 0.0
        %1397 = vmatpush1.msra.mxu0 0.0
        %1398 = vmatprep.subr.mxu0 0.0
        %1399 = vmatpush1.msra.mxu0 0.0
        %1400 = vmatprep.subr.mxu0 0.0
        %1401 = vmatpush1.msra.mxu0 0.0
        %1402 = vmatprep.subr.mxu0 0.0
        %1403 = vmatpush1.msra.mxu0 0.0
        %1404 = vmatprep.subr.mxu0 0.0
        %1405 = vmatpush1.msra.mxu0 0.0
        %1406 = vmatprep.subr.mxu0 0.0
        %1407 = vmatpush1.msra.mxu0 0.0
        %1408 = vmatprep.subr.mxu0 0.0
        %1409 = vmatpush1.msra.mxu0 0.0
        %1410 = vmatprep.subr.mxu0 0.0
        %1411 = vmatpush1.msra.mxu0 0.0
        %1412 = vmatprep.subr.mxu0 0.0
        %1413 = vmatpush1.msra.mxu0 0.0
        %1414 = vmatprep.subr.mxu0 0.0
        %1415 = vmatpush1.msra.mxu0 0.0
        %1416 = vmatprep.subr.mxu0 0.0
        %1417 = vmatpush1.msra.mxu0 0.0
        %1418 = vmatprep.subr.mxu0 0.0
        %1419 = vmatpush1.msra.mxu0 0.0
        %1420 = vmatprep.subr.mxu0 0.0
        %1421 = vmatpush1.msra.mxu0 0.0
        %1422 = vmatprep.subr.mxu0 0.0
        %1423 = vmatpush1.msra.mxu0 0.0
        %1424 = vmatprep.subr.mxu0 0.0
        %1425 = vmatpush1.msra.mxu0 0.0
        %1426 = vmatprep.subr.mxu0 0.0
        %1427 = vmatpush1.msra.mxu0 0.0
        %1428 = vmatprep.subr.mxu0 0.0
        %1429 = vmatpush1.msra.mxu0 0.0
        %1430 = vmatprep.subr.mxu0 0.0
        %1431 = vmatpush1.msra.mxu0 0.0
        %1432 = vmatprep.subr.mxu0 0.0
        %1433 = vmatpush1.msra.mxu0 0.0
        %1434 = vmatprep.subr.mxu0 0.0
        %1435 = vmatpush1.msra.mxu0 0.0
        %1436 = vmatprep.subr.mxu0 0.0
        %1437 = vmatpush1.msra.mxu0 0.0
        %1438 = vmatprep.subr.mxu0 0.0
        %1439 = vmatpush1.msra.mxu0 0.0
        %1440 = vmatprep.subr.mxu0 0.0
        %1441 = vmatpush1.msra.mxu0 0.0
        %1442 = vmatprep.subr.mxu0 0.0
        %1443 = vmatpush1.msra.mxu0 0.0
        %1444 = vmatprep.subr.mxu0 0.0
        %1445 = vmatpush1.msra.mxu0 0.0
        %1446 = vmatprep.subr.mxu0 0.0
        %1447 = vmatpush1.msra.mxu0 0.0
        %1448 = vmatprep.subr.mxu0 0.0
        %1449 = vmatpush1.msra.mxu0 0.0
        %1450 = vmatprep.mubr.f32.mxu0 0.0
        %1451 = vmatmul.mubr.f32.gmra.mrb[0].mxu0 %v1382
        %v1452 = vpop.f32.mrb[0].mxu0
        %v1453 = vadd.f32 0.0, %v1452
        %v1454 = vpop.f32.mrb[0].mxu0
        %1455 = vdwg.mxu0
        %v1456 = vadd.f32 %v1363, %v1453
        %v1457 = vld [vmem:[%s316] sm:$0xff]
        %v1458 = vld [vmem:[%s246 + $0x9] sm:$0x1]
        %v1459 = vld [vmem:[%s246 + $0x19] sm:$0x1]
        %v1460 = vld [vmem:[%s246 + $0x29] sm:$0x1]
        %v1461 = vld [vmem:[%s246 + $0x39] sm:$0x1]
        %v1466 = vrot.slane %v1459, 7
        %v1467 = vsel %vm327, %v1466, %v1458
        %v1468 = vrot.slane %v1460, 6
        %v1469 = vsel %vm330, %v1468, %v1467
        %v1470 = vrot.slane %v1461, 5
        %v1471 = vsel %vm333, %v1470, %v1469
        %v1473 = vsel %vm335, %v1457, 0
        %v1475 = vsel %vm339, %v1471, 0
        %1477 = vmatprep.subr.mxu0 0.0
        %1478 = vmatpush1.msra.mxu0 %v1475
        %1479 = vmatprep.subr.mxu0 0.0
        %1480 = vmatpush1.msra.mxu0 0.0
        %1481 = vmatprep.subr.mxu0 0.0
        %1482 = vmatpush1.msra.mxu0 0.0
        %1483 = vmatprep.subr.mxu0 0.0
        %1484 = vmatpush1.msra.mxu0 0.0
        %1485 = vmatprep.subr.mxu0 0.0
        %1486 = vmatpush1.msra.mxu0 0.0
        %1487 = vmatprep.subr.mxu0 0.0
        %1488 = vmatpush1.msra.mxu0 0.0
        %1489 = vmatprep.subr.mxu0 0.0
        %1490 = vmatpush1.msra.mxu0 0.0
        %1491 = vmatprep.subr.mxu0 0.0
        %1492 = vmatpush1.msra.mxu0 0.0
        %1493 = vmatprep.subr.mxu0 0.0
        %1494 = vmatpush1.msra.mxu0 0.0
        %1495 = vmatprep.subr.mxu0 0.0
        %1496 = vmatpush1.msra.mxu0 0.0
        %1497 = vmatprep.subr.mxu0 0.0
        %1498 = vmatpush1.msra.mxu0 0.0
        %1499 = vmatprep.subr.mxu0 0.0
        %1500 = vmatpush1.msra.mxu0 0.0
        %1501 = vmatprep.subr.mxu0 0.0
        %1502 = vmatpush1.msra.mxu0 0.0
        %1503 = vmatprep.subr.mxu0 0.0
        %1504 = vmatpush1.msra.mxu0 0.0
        %1505 = vmatprep.subr.mxu0 0.0
        %1506 = vmatpush1.msra.mxu0 0.0
        %1507 = vmatprep.subr.mxu0 0.0
        %1508 = vmatpush1.msra.mxu0 0.0
        %1509 = vmatprep.subr.mxu0 0.0
        %1510 = vmatpush1.msra.mxu0 0.0
        %1511 = vmatprep.subr.mxu0 0.0
        %1512 = vmatpush1.msra.mxu0 0.0
        %1513 = vmatprep.subr.mxu0 0.0
        %1514 = vmatpush1.msra.mxu0 0.0
        %1515 = vmatprep.subr.mxu0 0.0
        %1516 = vmatpush1.msra.mxu0 0.0
        %1517 = vmatprep.subr.mxu0 0.0
        %1518 = vmatpush1.msra.mxu0 0.0
        %1519 = vmatprep.subr.mxu0 0.0
        %1520 = vmatpush1.msra.mxu0 0.0
        %1521 = vmatprep.subr.mxu0 0.0
        %1522 = vmatpush1.msra.mxu0 0.0
        %1523 = vmatprep.subr.mxu0 0.0
        %1524 = vmatpush1.msra.mxu0 0.0
        %1525 = vmatprep.subr.mxu0 0.0
        %1526 = vmatpush1.msra.mxu0 0.0
        %1527 = vmatprep.subr.mxu0 0.0
        %1528 = vmatpush1.msra.mxu0 0.0
        %1529 = vmatprep.subr.mxu0 0.0
        %1530 = vmatpush1.msra.mxu0 0.0
        %1531 = vmatprep.subr.mxu0 0.0
        %1532 = vmatpush1.msra.mxu0 0.0
        %1533 = vmatprep.subr.mxu0 0.0
        %1534 = vmatpush1.msra.mxu0 0.0
        %1535 = vmatprep.subr.mxu0 0.0
        %1536 = vmatpush1.msra.mxu0 0.0
        %1537 = vmatprep.subr.mxu0 0.0
        %1538 = vmatpush1.msra.mxu0 0.0
        %1539 = vmatprep.subr.mxu0 0.0
        %1540 = vmatpush1.msra.mxu0 0.0
        %1541 = vmatprep.mubr.f32.mxu0 0.0
        %1542 = vmatmul.mubr.f32.gmra.mrb[0].mxu0 %v1473
        %v1543 = vpop.f32.mrb[0].mxu0
        %v1544 = vadd.f32 0.0, %v1543
        %v1545 = vpop.f32.mrb[0].mxu0
        %1546 = vdwg.mxu0
        %v1547 = vadd.f32 %v1456, %v1544
        %v1548 = vld [vmem:[%s497] sm:$0xff]
        %v1549 = vld [vmem:[%s246 + $0xa] sm:$0x1]
        %v1550 = vld [vmem:[%s246 + $0x1a] sm:$0x1]
        %v1551 = vld [vmem:[%s246 + $0x2a] sm:$0x1]
        %v1552 = vld [vmem:[%s246 + $0x3a] sm:$0x1]
        %v1557 = vrot.slane %v1550, 7
        %v1558 = vsel %vm327, %v1557, %v1549
        %v1559 = vrot.slane %v1551, 6
        %v1560 = vsel %vm330, %v1559, %v1558
        %v1561 = vrot.slane %v1552, 5
        %v1562 = vsel %vm333, %v1561, %v1560
        %v1564 = vsel %vm335, %v1548, 0
        %v1566 = vsel %vm339, %v1562, 0
        %1568 = vmatprep.subr.mxu0 0.0
        %1569 = vmatpush1.msra.mxu0 %v1566
        %1570 = vmatprep.subr.mxu0 0.0
        %1571 = vmatpush1.msra.mxu0 0.0
        %1572 = vmatprep.subr.mxu0 0.0
        %1573 = vmatpush1.msra.mxu0 0.0
        %1574 = vmatprep.subr.mxu0 0.0
        %1575 = vmatpush1.msra.mxu0 0.0
        %1576 = vmatprep.subr.mxu0 0.0
        %1577 = vmatpush1.msra.mxu0 0.0
        %1578 = vmatprep.subr.mxu0 0.0
        %1579 = vmatpush1.msra.mxu0 0.0
        %1580 = vmatprep.subr.mxu0 0.0
        %1581 = vmatpush1.msra.mxu0 0.0
        %1582 = vmatprep.subr.mxu0 0.0
        %1583 = vmatpush1.msra.mxu0 0.0
        %1584 = vmatprep.subr.mxu0 0.0
        %1585 = vmatpush1.msra.mxu0 0.0
        %1586 = vmatprep.subr.mxu0 0.0
        %1587 = vmatpush1.msra.mxu0 0.0
        %1588 = vmatprep.subr.mxu0 0.0
        %1589 = vmatpush1.msra.mxu0 0.0
        %1590 = vmatprep.subr.mxu0 0.0
        %1591 = vmatpush1.msra.mxu0 0.0
        %1592 = vmatprep.subr.mxu0 0.0
        %1593 = vmatpush1.msra.mxu0 0.0
        %1594 = vmatprep.subr.mxu0 0.0
        %1595 = vmatpush1.msra.mxu0 0.0
        %1596 = vmatprep.subr.mxu0 0.0
        %1597 = vmatpush1.msra.mxu0 0.0
        %1598 = vmatprep.subr.mxu0 0.0
        %1599 = vmatpush1.msra.mxu0 0.0
        %1600 = vmatprep.subr.mxu0 0.0
        %1601 = vmatpush1.msra.mxu0 0.0
        %1602 = vmatprep.subr.mxu0 0.0
        %1603 = vmatpush1.msra.mxu0 0.0
        %1604 = vmatprep.subr.mxu0 0.0
        %1605 = vmatpush1.msra.mxu0 0.0
        %1606 = vmatprep.subr.mxu0 0.0
        %1607 = vmatpush1.msra.mxu0 0.0
        %1608 = vmatprep.subr.mxu0 0.0
        %1609 = vmatpush1.msra.mxu0 0.0
        %1610 = vmatprep.subr.mxu0 0.0
        %1611 = vmatpush1.msra.mxu0 0.0
        %1612 = vmatprep.subr.mxu0 0.0
        %1613 = vmatpush1.msra.mxu0 0.0
        %1614 = vmatprep.subr.mxu0 0.0
        %1615 = vmatpush1.msra.mxu0 0.0
        %1616 = vmatprep.subr.mxu0 0.0
        %1617 = vmatpush1.msra.mxu0 0.0
        %1618 = vmatprep.subr.mxu0 0.0
        %1619 = vmatpush1.msra.mxu0 0.0
        %1620 = vmatprep.subr.mxu0 0.0
        %1621 = vmatpush1.msra.mxu0 0.0
        %1622 = vmatprep.subr.mxu0 0.0
        %1623 = vmatpush1.msra.mxu0 0.0
        %1624 = vmatprep.subr.mxu0 0.0
        %1625 = vmatpush1.msra.mxu0 0.0
        %1626 = vmatprep.subr.mxu0 0.0
        %1627 = vmatpush1.msra.mxu0 0.0
        %1628 = vmatprep.subr.mxu0 0.0
        %1629 = vmatpush1.msra.mxu0 0.0
        %1630 = vmatprep.subr.mxu0 0.0
        %1631 = vmatpush1.msra.mxu0 0.0
        %1632 = vmatprep.mubr.f32.mxu0 0.0
        %1633 = vmatmul.mubr.f32.gmra.mrb[0].mxu0 %v1564
        %v1634 = vpop.f32.mrb[0].mxu0
        %v1635 = vadd.f32 0.0, %v1634
        %v1636 = vpop.f32.mrb[0].mxu0
        %1637 = vdwg.mxu0
        %v1638 = vadd.f32 %v1547, %v1635
        %v1639 = vadd.f32 %v1638, %v592
        %v1640 = vmax.f32 %v1639, 0.0
        %v1642 = vcombine.high %v1640, %v1640
        %v1644 = vunpack.c.l.s4 1966171168
        %v1645 = vunpack.c.0.s8 %v1644
        %v1646 = vlaneseq
        %v1647 = vshrl.u32 %v1646, 7
        %v1648 = vsub.s32 %v1645, %v1647
        %v1649 = vrot.slane %v1640, %v1648
        %v1651 = vunpack.c.l.s4 1966171168
        %v1652 = vunpack.c.0.s8 %v1651
        %v1653 = vlaneseq
        %v1654 = vshrl.u32 %v1653, 7
        %v1655 = vsub.s32 %v1652, %v1654
        %v1656 = vrot.slane %v1642, %v1655
        %v1657 = vcombine.high %v1649, %v1649
        %v1658 = vcombine.high %v1656, %v1656
        %v1660 = vunpack.c.l.s4 1966171168
        %v1661 = vunpack.c.0.s8 %v1660
        %v1662 = vlaneseq
        %v1663 = vshrl.u32 %v1662, 7
        %v1664 = vsub.s32 %v1661, %v1663
        %v1665 = vrot.slane %v1649, %v1664
        %v1667 = vunpack.c.l.s4 1966171168
        %v1668 = vunpack.c.0.s8 %v1667
        %v1669 = vlaneseq
        %v1670 = vshrl.u32 %v1669, 7
        %v1671 = vsub.s32 %v1668, %v1670
        %v1672 = vrot.slane %v1656, %v1671
        %v1674 = vunpack.c.l.s4 1966171168
        %v1675 = vunpack.c.0.s8 %v1674
        %v1676 = vlaneseq
        %v1677 = vshrl.u32 %v1676, 7
        %v1678 = vsub.s32 %v1675, %v1677
        %v1679 = vrot.slane %v1657, %v1678
        %v1681 = vunpack.c.l.s4 1966171168
        %v1682 = vunpack.c.0.s8 %v1681
        %v1683 = vlaneseq
        %v1684 = vshrl.u32 %v1683, 7
        %v1685 = vsub.s32 %v1682, %v1684
        %v1686 = vrot.slane %v1658, %v1685
        %v1687 = vcombine.high %v1665, %v1665
        %v1688 = vcombine.high %v1672, %v1672
        %v1689 = vcombine.high %v1679, %v1679
        %v1690 = vcombine.high %v1686, %v1686
        %1699 = vst.msk [vmem:[%s654 + $0x2] sm:$0x1] %vm655, %v1665
        %1700 = vst.msk [vmem:[%s654 + $0x6] sm:$0x1] %vm655, %v1679
        %1701 = vst.msk [vmem:[%s654 + $0xa] sm:$0x1] %vm655, %v1687
        %1702 = vst.msk [vmem:[%s654 + $0xe] sm:$0x1] %vm655, %v1689
        %1703 = vst.msk [vmem:[%s654 + $0x12] sm:$0x1] %vm655, %v1672
        %1704 = vst.msk [vmem:[%s654 + $0x16] sm:$0x1] %vm655, %v1686
        %1705 = vst.msk [vmem:[%s654 + $0x1a] sm:$0x1] %vm655, %v1688
        %1706 = vst.msk [vmem:[%s654 + $0x1e] sm:$0x1] %vm655, %v1690
        %v1707 = vld [vmem:[%s0] sm:$0xff]
        %v1708 = vld [vmem:[%s246 + $0xa] sm:$0x1]
        %v1709 = vld [vmem:[%s246 + $0x1a] sm:$0x1]
        %v1710 = vld [vmem:[%s246 + $0x2a] sm:$0x1]
        %v1711 = vld [vmem:[%s246 + $0x3a] sm:$0x1]
        %v1712 = vld [vmem:[%s669] sm:$0xff]
        %v1713 = vld [vmem:[%s246 + $0xb] sm:$0x1]
        %v1714 = vld [vmem:[%s246 + $0x1b] sm:$0x1]
        %v1715 = vld [vmem:[%s246 + $0x2b] sm:$0x1]
        %v1716 = vld [vmem:[%s246 + $0x3b] sm:$0x1]
        %v1721 = vrot.slane %v1714, 7
        %v1722 = vsel %vm327, %v1721, %v1713
        %v1723 = vrot.slane %v1715, 6
        %v1724 = vsel %vm330, %v1723, %v1722
        %v1725 = vrot.slane %v1716, 5
        %v1726 = vsel %vm333, %v1725, %v1724
        %v1728 = vsel %vm335, %v1712, 0
        %v1730 = vsel %vm339, %v1726, 0
        %1732 = vmatprep.subr.mxu0 0.0
        %1733 = vmatpush1.msra.mxu0 %v1730
        %1734 = vmatprep.subr.mxu0 0.0
        %1735 = vmatpush1.msra.mxu0 0.0
        %1736 = vmatprep.subr.mxu0 0.0
        %1737 = vmatpush1.msra.mxu0 0.0
        %1738 = vmatprep.subr.mxu0 0.0
        %1739 = vmatpush1.msra.mxu0 0.0
        %1740 = vmatprep.subr.mxu0 0.0
        %1741 = vmatpush1.msra.mxu0 0.0
        %1742 = vmatprep.subr.mxu0 0.0
        %1743 = vmatpush1.msra.mxu0 0.0
        %1744 = vmatprep.subr.mxu0 0.0
        %1745 = vmatpush1.msra.mxu0 0.0
        %1746 = vmatprep.subr.mxu0 0.0
        %1747 = vmatpush1.msra.mxu0 0.0
        %1748 = vmatprep.subr.mxu0 0.0
        %1749 = vmatpush1.msra.mxu0 0.0
        %1750 = vmatprep.subr.mxu0 0.0
        %1751 = vmatpush1.msra.mxu0 0.0
        %1752 = vmatprep.subr.mxu0 0.0
        %1753 = vmatpush1.msra.mxu0 0.0
        %1754 = vmatprep.subr.mxu0 0.0
        %1755 = vmatpush1.msra.mxu0 0.0
        %1756 = vmatprep.subr.mxu0 0.0
        %1757 = vmatpush1.msra.mxu0 0.0
        %1758 = vmatprep.subr.mxu0 0.0
        %1759 = vmatpush1.msra.mxu0 0.0
        %1760 = vmatprep.subr.mxu0 0.0
        %1761 = vmatpush1.msra.mxu0 0.0
        %1762 = vmatprep.subr.mxu0 0.0
        %1763 = vmatpush1.msra.mxu0 0.0
        %1764 = vmatprep.subr.mxu0 0.0
        %1765 = vmatpush1.msra.mxu0 0.0
        %1766 = vmatprep.subr.mxu0 0.0
        %1767 = vmatpush1.msra.mxu0 0.0
        %1768 = vmatprep.subr.mxu0 0.0
        %1769 = vmatpush1.msra.mxu0 0.0
        %1770 = vmatprep.subr.mxu0 0.0
        %1771 = vmatpush1.msra.mxu0 0.0
        %1772 = vmatprep.subr.mxu0 0.0
        %1773 = vmatpush1.msra.mxu0 0.0
        %1774 = vmatprep.subr.mxu0 0.0
        %1775 = vmatpush1.msra.mxu0 0.0
        %1776 = vmatprep.subr.mxu0 0.0
        %1777 = vmatpush1.msra.mxu0 0.0
        %1778 = vmatprep.subr.mxu0 0.0
        %1779 = vmatpush1.msra.mxu0 0.0
        %1780 = vmatprep.subr.mxu0 0.0
        %1781 = vmatpush1.msra.mxu0 0.0
        %1782 = vmatprep.subr.mxu0 0.0
        %1783 = vmatpush1.msra.mxu0 0.0
        %1784 = vmatprep.subr.mxu0 0.0
        %1785 = vmatpush1.msra.mxu0 0.0
        %1786 = vmatprep.subr.mxu0 0.0
        %1787 = vmatpush1.msra.mxu0 0.0
        %1788 = vmatprep.subr.mxu0 0.0
        %1789 = vmatpush1.msra.mxu0 0.0
        %1790 = vmatprep.subr.mxu0 0.0
        %1791 = vmatpush1.msra.mxu0 0.0
        %1792 = vmatprep.subr.mxu0 0.0
        %1793 = vmatpush1.msra.mxu0 0.0
        %1794 = vmatprep.subr.mxu0 0.0
        %1795 = vmatpush1.msra.mxu0 0.0
        %1796 = vmatprep.mubr.f32.mxu0 0.0
        %1797 = vmatmul.mubr.f32.gmra.mrb[0].mxu0 %v1728
        %v1798 = vpop.f32.mrb[0].mxu0
        %v1799 = vadd.f32 0.0, %v1798
        %v1800 = vpop.f32.mrb[0].mxu0
        %1801 = vdwg.mxu0
        %v1806 = vrot.slane %v1709, 7
        %v1807 = vsel %vm327, %v1806, %v1708
        %v1808 = vrot.slane %v1710, 6
        %v1809 = vsel %vm330, %v1808, %v1807
        %v1810 = vrot.slane %v1711, 5
        %v1811 = vsel %vm333, %v1810, %v1809
        %v1813 = vsel %vm335, %v1707, 0
        %v1815 = vsel %vm339, %v1811, 0
        %1817 = vmatprep.subr.mxu0 0.0
        %1818 = vmatpush1.msra.mxu0 %v1815
        %1819 = vmatprep.subr.mxu0 0.0
        %1820 = vmatpush1.msra.mxu0 0.0
        %1821 = vmatprep.subr.mxu0 0.0
        %1822 = vmatpush1.msra.mxu0 0.0
        %1823 = vmatprep.subr.mxu0 0.0
        %1824 = vmatpush1.msra.mxu0 0.0
        %1825 = vmatprep.subr.mxu0 0.0
        %1826 = vmatpush1.msra.mxu0 0.0
        %1827 = vmatprep.subr.mxu0 0.0
        %1828 = vmatpush1.msra.mxu0 0.0
        %1829 = vmatprep.subr.mxu0 0.0
        %1830 = vmatpush1.msra.mxu0 0.0
        %1831 = vmatprep.subr.mxu0 0.0
        %1832 = vmatpush1.msra.mxu0 0.0
        %1833 = vmatprep.subr.mxu0 0.0
        %1834 = vmatpush1.msra.mxu0 0.0
        %1835 = vmatprep.subr.mxu0 0.0
        %1836 = vmatpush1.msra.mxu0 0.0
        %1837 = vmatprep.subr.mxu0 0.0
        %1838 = vmatpush1.msra.mxu0 0.0
        %1839 = vmatprep.subr.mxu0 0.0
        %1840 = vmatpush1.msra.mxu0 0.0
        %1841 = vmatprep.subr.mxu0 0.0
        %1842 = vmatpush1.msra.mxu0 0.0
        %1843 = vmatprep.subr.mxu0 0.0
        %1844 = vmatpush1.msra.mxu0 0.0
        %1845 = vmatprep.subr.mxu0 0.0
        %1846 = vmatpush1.msra.mxu0 0.0
        %1847 = vmatprep.subr.mxu0 0.0
        %1848 = vmatpush1.msra.mxu0 0.0
        %1849 = vmatprep.subr.mxu0 0.0
        %1850 = vmatpush1.msra.mxu0 0.0
        %1851 = vmatprep.subr.mxu0 0.0
        %1852 = vmatpush1.msra.mxu0 0.0
        %1853 = vmatprep.subr.mxu0 0.0
        %1854 = vmatpush1.msra.mxu0 0.0
        %1855 = vmatprep.subr.mxu0 0.0
        %1856 = vmatpush1.msra.mxu0 0.0
        %1857 = vmatprep.subr.mxu0 0.0
        %1858 = vmatpush1.msra.mxu0 0.0
        %1859 = vmatprep.subr.mxu0 0.0
        %1860 = vmatpush1.msra.mxu0 0.0
        %1861 = vmatprep.subr.mxu0 0.0
        %1862 = vmatpush1.msra.mxu0 0.0
        %1863 = vmatprep.subr.mxu0 0.0
        %1864 = vmatpush1.msra.mxu0 0.0
        %1865 = vmatprep.subr.mxu0 0.0
        %1866 = vmatpush1.msra.mxu0 0.0
        %1867 = vmatprep.subr.mxu0 0.0
        %1868 = vmatpush1.msra.mxu0 0.0
        %1869 = vmatprep.subr.mxu0 0.0
        %1870 = vmatpush1.msra.mxu0 0.0
        %1871 = vmatprep.subr.mxu0 0.0
        %1872 = vmatpush1.msra.mxu0 0.0
        %1873 = vmatprep.subr.mxu0 0.0
        %1874 = vmatpush1.msra.mxu0 0.0
        %1875 = vmatprep.subr.mxu0 0.0
        %1876 = vmatpush1.msra.mxu0 0.0
        %1877 = vmatprep.subr.mxu0 0.0
        %1878 = vmatpush1.msra.mxu0 0.0
        %1879 = vmatprep.subr.mxu0 0.0
        %1880 = vmatpush1.msra.mxu0 0.0
        %1881 = vmatprep.mubr.f32.mxu0 0.0
        %1882 = vmatmul.mubr.f32.gmra.mrb[0].mxu0 %v1813
        %v1883 = vpop.f32.mrb[0].mxu0
        %v1884 = vadd.f32 %v1799, %v1883
        %v1885 = vpop.f32.mrb[0].mxu0
        %1886 = vdwg.mxu0
        %v1887 = vld [vmem:[%s310] sm:$0xff]
        %v1888 = vld [vmem:[%s246 + $0xc] sm:$0x1]
        %v1889 = vld [vmem:[%s246 + $0x1c] sm:$0x1]
        %v1890 = vld [vmem:[%s246 + $0x2c] sm:$0x1]
        %v1891 = vld [vmem:[%s246 + $0x3c] sm:$0x1]
        %v1896 = vrot.slane %v1889, 7
        %v1897 = vsel %vm327, %v1896, %v1888
        %v1898 = vrot.slane %v1890, 6
        %v1899 = vsel %vm330, %v1898, %v1897
        %v1900 = vrot.slane %v1891, 5
        %v1901 = vsel %vm333, %v1900, %v1899
        %v1903 = vsel %vm335, %v1887, 0
        %v1905 = vsel %vm339, %v1901, 0
        %1907 = vmatprep.subr.mxu0 0.0
        %1908 = vmatpush1.msra.mxu0 %v1905
        %1909 = vmatprep.subr.mxu0 0.0
        %1910 = vmatpush1.msra.mxu0 0.0
        %1911 = vmatprep.subr.mxu0 0.0
        %1912 = vmatpush1.msra.mxu0 0.0
        %1913 = vmatprep.subr.mxu0 0.0
        %1914 = vmatpush1.msra.mxu0 0.0
        %1915 = vmatprep.subr.mxu0 0.0
        %1916 = vmatpush1.msra.mxu0 0.0
        %1917 = vmatprep.subr.mxu0 0.0
        %1918 = vmatpush1.msra.mxu0 0.0
        %1919 = vmatprep.subr.mxu0 0.0
        %1920 = vmatpush1.msra.mxu0 0.0
        %1921 = vmatprep.subr.mxu0 0.0
        %1922 = vmatpush1.msra.mxu0 0.0
        %1923 = vmatprep.subr.mxu0 0.0
        %1924 = vmatpush1.msra.mxu0 0.0
        %1925 = vmatprep.subr.mxu0 0.0
        %1926 = vmatpush1.msra.mxu0 0.0
        %1927 = vmatprep.subr.mxu0 0.0
        %1928 = vmatpush1.msra.mxu0 0.0
        %1929 = vmatprep.subr.mxu0 0.0
        %1930 = vmatpush1.msra.mxu0 0.0
        %1931 = vmatprep.subr.mxu0 0.0
        %1932 = vmatpush1.msra.mxu0 0.0
        %1933 = vmatprep.subr.mxu0 0.0
        %1934 = vmatpush1.msra.mxu0 0.0
        %1935 = vmatprep.subr.mxu0 0.0
        %1936 = vmatpush1.msra.mxu0 0.0
        %1937 = vmatprep.subr.mxu0 0.0
        %1938 = vmatpush1.msra.mxu0 0.0
        %1939 = vmatprep.subr.mxu0 0.0
        %1940 = vmatpush1.msra.mxu0 0.0
        %1941 = vmatprep.subr.mxu0 0.0
        %1942 = vmatpush1.msra.mxu0 0.0
        %1943 = vmatprep.subr.mxu0 0.0
        %1944 = vmatpush1.msra.mxu0 0.0
        %1945 = vmatprep.subr.mxu0 0.0
        %1946 = vmatpush1.msra.mxu0 0.0
        %1947 = vmatprep.subr.mxu0 0.0
        %1948 = vmatpush1.msra.mxu0 0.0
        %1949 = vmatprep.subr.mxu0 0.0
        %1950 = vmatpush1.msra.mxu0 0.0
        %1951 = vmatprep.subr.mxu0 0.0
        %1952 = vmatpush1.msra.mxu0 0.0
        %1953 = vmatprep.subr.mxu0 0.0
        %1954 = vmatpush1.msra.mxu0 0.0
        %1955 = vmatprep.subr.mxu0 0.0
        %1956 = vmatpush1.msra.mxu0 0.0
        %1957 = vmatprep.subr.mxu0 0.0
        %1958 = vmatpush1.msra.mxu0 0.0
        %1959 = vmatprep.subr.mxu0 0.0
        %1960 = vmatpush1.msra.mxu0 0.0
        %1961 = vmatprep.subr.mxu0 0.0
        %1962 = vmatpush1.msra.mxu0 0.0
        %1963 = vmatprep.subr.mxu0 0.0
        %1964 = vmatpush1.msra.mxu0 0.0
        %1965 = vmatprep.subr.mxu0 0.0
        %1966 = vmatpush1.msra.mxu0 0.0
        %1967 = vmatprep.subr.mxu0 0.0
        %1968 = vmatpush1.msra.mxu0 0.0
        %1969 = vmatprep.subr.mxu0 0.0
        %1970 = vmatpush1.msra.mxu0 0.0
        %1971 = vmatprep.mubr.f32.mxu0 0.0
        %1972 = vmatmul.mubr.f32.gmra.mrb[0].mxu0 %v1903
        %v1973 = vpop.f32.mrb[0].mxu0
        %v1974 = vadd.f32 0.0, %v1973
        %v1975 = vpop.f32.mrb[0].mxu0
        %1976 = vdwg.mxu0
        %v1977 = vadd.f32 %v1884, %v1974
        %v1978 = vld [vmem:[%s316] sm:$0xff]
        %v1979 = vld [vmem:[%s246 + $0xd] sm:$0x1]
        %v1980 = vld [vmem:[%s246 + $0x1d] sm:$0x1]
        %v1981 = vld [vmem:[%s246 + $0x2d] sm:$0x1]
        %v1982 = vld [vmem:[%s246 + $0x3d] sm:$0x1]
        %v1987 = vrot.slane %v1980, 7
        %v1988 = vsel %vm327, %v1987, %v1979
        %v1989 = vrot.slane %v1981, 6
        %v1990 = vsel %vm330, %v1989, %v1988
        %v1991 = vrot.slane %v1982, 5
        %v1992 = vsel %vm333, %v1991, %v1990
        %v1994 = vsel %vm335, %v1978, 0
        %v1996 = vsel %vm339, %v1992, 0
        %1998 = vmatprep.subr.mxu0 0.0
        %1999 = vmatpush1.msra.mxu0 %v1996
        %2000 = vmatprep.subr.mxu0 0.0
        %2001 = vmatpush1.msra.mxu0 0.0
        %2002 = vmatprep.subr.mxu0 0.0
        %2003 = vmatpush1.msra.mxu0 0.0
        %2004 = vmatprep.subr.mxu0 0.0
        %2005 = vmatpush1.msra.mxu0 0.0
        %2006 = vmatprep.subr.mxu0 0.0
        %2007 = vmatpush1.msra.mxu0 0.0
        %2008 = vmatprep.subr.mxu0 0.0
        %2009 = vmatpush1.msra.mxu0 0.0
        %2010 = vmatprep.subr.mxu0 0.0
        %2011 = vmatpush1.msra.mxu0 0.0
        %2012 = vmatprep.subr.mxu0 0.0
        %2013 = vmatpush1.msra.mxu0 0.0
        %2014 = vmatprep.subr.mxu0 0.0
        %2015 = vmatpush1.msra.mxu0 0.0
        %2016 = vmatprep.subr.mxu0 0.0
        %2017 = vmatpush1.msra.mxu0 0.0
        %2018 = vmatprep.subr.mxu0 0.0
        %2019 = vmatpush1.msra.mxu0 0.0
        %2020 = vmatprep.subr.mxu0 0.0
        %2021 = vmatpush1.msra.mxu0 0.0
        %2022 = vmatprep.subr.mxu0 0.0
        %2023 = vmatpush1.msra.mxu0 0.0
        %2024 = vmatprep.subr.mxu0 0.0
        %2025 = vmatpush1.msra.mxu0 0.0
        %2026 = vmatprep.subr.mxu0 0.0
        %2027 = vmatpush1.msra.mxu0 0.0
        %2028 = vmatprep.subr.mxu0 0.0
        %2029 = vmatpush1.msra.mxu0 0.0
        %2030 = vmatprep.subr.mxu0 0.0
        %2031 = vmatpush1.msra.mxu0 0.0
        %2032 = vmatprep.subr.mxu0 0.0
        %2033 = vmatpush1.msra.mxu0 0.0
        %2034 = vmatprep.subr.mxu0 0.0
        %2035 = vmatpush1.msra.mxu0 0.0
        %2036 = vmatprep.subr.mxu0 0.0
        %2037 = vmatpush1.msra.mxu0 0.0
        %2038 = vmatprep.subr.mxu0 0.0
        %2039 = vmatpush1.msra.mxu0 0.0
        %2040 = vmatprep.subr.mxu0 0.0
        %2041 = vmatpush1.msra.mxu0 0.0
        %2042 = vmatprep.subr.mxu0 0.0
        %2043 = vmatpush1.msra.mxu0 0.0
        %2044 = vmatprep.subr.mxu0 0.0
        %2045 = vmatpush1.msra.mxu0 0.0
        %2046 = vmatprep.subr.mxu0 0.0
        %2047 = vmatpush1.msra.mxu0 0.0
        %2048 = vmatprep.subr.mxu0 0.0
        %2049 = vmatpush1.msra.mxu0 0.0
        %2050 = vmatprep.subr.mxu0 0.0
        %2051 = vmatpush1.msra.mxu0 0.0
        %2052 = vmatprep.subr.mxu0 0.0
        %2053 = vmatpush1.msra.mxu0 0.0
        %2054 = vmatprep.subr.mxu0 0.0
        %2055 = vmatpush1.msra.mxu0 0.0
        %2056 = vmatprep.subr.mxu0 0.0
        %2057 = vmatpush1.msra.mxu0 0.0
        %2058 = vmatprep.subr.mxu0 0.0
        %2059 = vmatpush1.msra.mxu0 0.0
        %2060 = vmatprep.subr.mxu0 0.0
        %2061 = vmatpush1.msra.mxu0 0.0
        %2062 = vmatprep.mubr.f32.mxu0 0.0
        %2063 = vmatmul.mubr.f32.gmra.mrb[0].mxu0 %v1994
        %v2064 = vpop.f32.mrb[0].mxu0
        %v2065 = vadd.f32 0.0, %v2064
        %v2066 = vpop.f32.mrb[0].mxu0
        %2067 = vdwg.mxu0
        %v2068 = vadd.f32 %v1977, %v2065
        %v2069 = vld [vmem:[%s497] sm:$0xff]
        %v2070 = vld [vmem:[%s246 + $0xe] sm:$0x1]
        %v2071 = vld [vmem:[%s246 + $0x1e] sm:$0x1]
        %v2072 = vld [vmem:[%s246 + $0x2e] sm:$0x1]
        %v2073 = vld [vmem:[%s246 + $0x3e] sm:$0x1]
        %v2078 = vrot.slane %v2071, 7
        %v2079 = vsel %vm327, %v2078, %v2070
        %v2080 = vrot.slane %v2072, 6
        %v2081 = vsel %vm330, %v2080, %v2079
        %v2082 = vrot.slane %v2073, 5
        %v2083 = vsel %vm333, %v2082, %v2081
        %v2085 = vsel %vm335, %v2069, 0
        %v2087 = vsel %vm339, %v2083, 0
        %2089 = vmatprep.subr.mxu0 0.0
        %2090 = vmatpush1.msra.mxu0 %v2087
        %2091 = vmatprep.subr.mxu0 0.0
        %2092 = vmatpush1.msra.mxu0 0.0
        %2093 = vmatprep.subr.mxu0 0.0
        %2094 = vmatpush1.msra.mxu0 0.0
        %2095 = vmatprep.subr.mxu0 0.0
        %2096 = vmatpush1.msra.mxu0 0.0
        %2097 = vmatprep.subr.mxu0 0.0
        %2098 = vmatpush1.msra.mxu0 0.0
        %2099 = vmatprep.subr.mxu0 0.0
        %2100 = vmatpush1.msra.mxu0 0.0
        %2101 = vmatprep.subr.mxu0 0.0
        %2102 = vmatpush1.msra.mxu0 0.0
        %2103 = vmatprep.subr.mxu0 0.0
        %2104 = vmatpush1.msra.mxu0 0.0
        %2105 = vmatprep.subr.mxu0 0.0
        %2106 = vmatpush1.msra.mxu0 0.0
        %2107 = vmatprep.subr.mxu0 0.0
        %2108 = vmatpush1.msra.mxu0 0.0
        %2109 = vmatprep.subr.mxu0 0.0
        %2110 = vmatpush1.msra.mxu0 0.0
        %2111 = vmatprep.subr.mxu0 0.0
        %2112 = vmatpush1.msra.mxu0 0.0
        %2113 = vmatprep.subr.mxu0 0.0
        %2114 = vmatpush1.msra.mxu0 0.0
        %2115 = vmatprep.subr.mxu0 0.0
        %2116 = vmatpush1.msra.mxu0 0.0
        %2117 = vmatprep.subr.mxu0 0.0
        %2118 = vmatpush1.msra.mxu0 0.0
        %2119 = vmatprep.subr.mxu0 0.0
        %2120 = vmatpush1.msra.mxu0 0.0
        %2121 = vmatprep.subr.mxu0 0.0
        %2122 = vmatpush1.msra.mxu0 0.0
        %2123 = vmatprep.subr.mxu0 0.0
        %2124 = vmatpush1.msra.mxu0 0.0
        %2125 = vmatprep.subr.mxu0 0.0
        %2126 = vmatpush1.msra.mxu0 0.0
        %2127 = vmatprep.subr.mxu0 0.0
        %2128 = vmatpush1.msra.mxu0 0.0
        %2129 = vmatprep.subr.mxu0 0.0
        %2130 = vmatpush1.msra.mxu0 0.0
        %2131 = vmatprep.subr.mxu0 0.0
        %2132 = vmatpush1.msra.mxu0 0.0
        %2133 = vmatprep.subr.mxu0 0.0
        %2134 = vmatpush1.msra.mxu0 0.0
        %2135 = vmatprep.subr.mxu0 0.0
        %2136 = vmatpush1.msra.mxu0 0.0
        %2137 = vmatprep.subr.mxu0 0.0
        %2138 = vmatpush1.msra.mxu0 0.0
        %2139 = vmatprep.subr.mxu0 0.0
        %2140 = vmatpush1.msra.mxu0 0.0
        %2141 = vmatprep.subr.mxu0 0.0
        %2142 = vmatpush1.msra.mxu0 0.0
        %2143 = vmatprep.subr.mxu0 0.0
        %2144 = vmatpush1.msra.mxu0 0.0
        %2145 = vmatprep.subr.mxu0 0.0
        %2146 = vmatpush1.msra.mxu0 0.0
        %2147 = vmatprep.subr.mxu0 0.0
        %2148 = vmatpush1.msra.mxu0 0.0
        %2149 = vmatprep.subr.mxu0 0.0
        %2150 = vmatpush1.msra.mxu0 0.0
        %2151 = vmatprep.subr.mxu0 0.0
        %2152 = vmatpush1.msra.mxu0 0.0
        %2153 = vmatprep.mubr.f32.mxu0 0.0
        %2154 = vmatmul.mubr.f32.gmra.mrb[0].mxu0 %v2085
        %v2155 = vpop.f32.mrb[0].mxu0
        %v2156 = vadd.f32 0.0, %v2155
        %v2157 = vpop.f32.mrb[0].mxu0
        %2158 = vdwg.mxu0
        %v2159 = vadd.f32 %v2068, %v2156
        %v2160 = vadd.f32 %v2159, %v592
        %v2161 = vmax.f32 %v2160, 0.0
        %v2163 = vcombine.high %v2161, %v2161
        %v2165 = vunpack.c.l.s4 1966171168
        %v2166 = vunpack.c.0.s8 %v2165
        %v2167 = vlaneseq
        %v2168 = vshrl.u32 %v2167, 7
        %v2169 = vsub.s32 %v2166, %v2168
        %v2170 = vrot.slane %v2161, %v2169
        %v2172 = vunpack.c.l.s4 1966171168
        %v2173 = vunpack.c.0.s8 %v2172
        %v2174 = vlaneseq
        %v2175 = vshrl.u32 %v2174, 7
        %v2176 = vsub.s32 %v2173, %v2175
        %v2177 = vrot.slane %v2163, %v2176
        %v2178 = vcombine.high %v2170, %v2170
        %v2179 = vcombine.high %v2177, %v2177
        %v2181 = vunpack.c.l.s4 1966171168
        %v2182 = vunpack.c.0.s8 %v2181
        %v2183 = vlaneseq
        %v2184 = vshrl.u32 %v2183, 7
        %v2185 = vsub.s32 %v2182, %v2184
        %v2186 = vrot.slane %v2170, %v2185
        %v2188 = vunpack.c.l.s4 1966171168
        %v2189 = vunpack.c.0.s8 %v2188
        %v2190 = vlaneseq
        %v2191 = vshrl.u32 %v2190, 7
        %v2192 = vsub.s32 %v2189, %v2191
        %v2193 = vrot.slane %v2177, %v2192
        %v2195 = vunpack.c.l.s4 1966171168
        %v2196 = vunpack.c.0.s8 %v2195
        %v2197 = vlaneseq
        %v2198 = vshrl.u32 %v2197, 7
        %v2199 = vsub.s32 %v2196, %v2198
        %v2200 = vrot.slane %v2178, %v2199
        %v2202 = vunpack.c.l.s4 1966171168
        %v2203 = vunpack.c.0.s8 %v2202
        %v2204 = vlaneseq
        %v2205 = vshrl.u32 %v2204, 7
        %v2206 = vsub.s32 %v2203, %v2205
        %v2207 = vrot.slane %v2179, %v2206
        %v2208 = vcombine.high %v2186, %v2186
        %v2209 = vcombine.high %v2193, %v2193
        %v2210 = vcombine.high %v2200, %v2200
        %v2211 = vcombine.high %v2207, %v2207
        %2220 = vst.msk [vmem:[%s654 + $0x3] sm:$0x1] %vm655, %v2186
        %2221 = vst.msk [vmem:[%s654 + $0x7] sm:$0x1] %vm655, %v2200
        %2222 = vst.msk [vmem:[%s654 + $0xb] sm:$0x1] %vm655, %v2208
        %2223 = vst.msk [vmem:[%s654 + $0xf] sm:$0x1] %vm655, %v2210
        %2224 = vst.msk [vmem:[%s654 + $0x13] sm:$0x1] %vm655, %v2193
        %2225 = vst.msk [vmem:[%s654 + $0x17] sm:$0x1] %vm655, %v2207
        %2226 = vst.msk [vmem:[%s654 + $0x1b] sm:$0x1] %vm655, %v2209
        %2227 = vst.msk [vmem:[%s654 + $0x1f] sm:$0x1] %vm655, %v2211
        %s2228 = sand.u32 %s144, 1
        %s2229 = scalar_lea.sflag [#allocation4], %s2228
        %s2230 = sand.u32 %s144, 1
        %s2231 = smul.addr %s2230, 96
        %s2232 = scalar_lea.vmem [#allocation7], %s2231
        // Predicated region
        $region45: #{tpu_custom_call.1} parent=35 // pred_check
          %p2233 = pneg %p154
        $region46: #{tpu_custom_call.1} parent=35 // pred_check_branch
          %2235 = sbr.rel (%p2233) target = $region48
        $region47: #{tpu_custom_call.1} parent=35 // pred_region
          %s2237 = ssub.s32 1536, 1536
          %2238 = vsyncadd %s2229, %s2237
          %s2239 = smul.addr %s28, 24
          %s2240 = sadd.s32 %s29, %s2239
          %s2241 = smul.addr %s2240, 64
          %s2242 = scalar_lea.hbm %s4, %s2241
          %s2243 = sshll.u32 %s2232, 4
          %s2244 = int_to_ptr.vmem [resolvable:$true] %s2243
          %2249 = dma.vmem_to_hbm [thread:$0]  %s2244, 1536, %s2242, %s2229, 64, 64, 4
        $region48: #{tpu_custom_call.1} parent=35 // pred_fallthru
          _
      $region36: #{tpu_custom_call.1} parent=5 // pred_fallthru
        _
      %p2250 = scmp.le.s32.totalorder 2, %s19
      // Predicated region
      $region49: #{tpu_custom_call.1} parent=5 // pred_check
        %p2251 = pneg %p2250
      $region50: #{tpu_custom_call.1} parent=5 // pred_check_branch
        %2253 = sbr.rel (%p2251) target = $region52
      $region51: #{tpu_custom_call.1} parent=5 // pred_region
        %s2254 = ssub.s32 %s19, 2
        // Predicated region
        $region53: #{tpu_custom_call.1} parent=51 // pred_check
          %p2255 = pneg %p160
        $region54: #{tpu_custom_call.1} parent=51 // pred_check_branch
          %2257 = sbr.rel (%p2255) target = $region56
        $region55: #{tpu_custom_call.1} parent=51 // pred_region
          %s2258 = sand.u32 %s145, 1
          %s2259 = scalar_lea.sflag [#allocation4], %s2258
          %s2260 = sand.u32 %s145, 1
          %s2261 = smul.addr %s2260, 96
          %s2262 = scalar_lea.vmem [#allocation7], %s2261
          %2263 = dma.done %s2259, 1536
        $region56: #{tpu_custom_call.1} parent=51 // pred_fallthru
          _
      $region52: #{tpu_custom_call.1} parent=5 // pred_fallthru
        _
    $region6: #{tpu_custom_call.1} parent=1 // loop_footer
      %s23 = sadd.s32 1, %s19
    $region7: #{tpu_custom_call.1} parent=1 // loop_footer_branch
      %18 = sbr.rel target = $region3
    $region8: #{tpu_custom_call.1} parent=1 // loop_exit
      _
    %2264 = vsyncpa [#allocation3], 1
    %s2265 = scalar_lea.sflag [#allocation3], 1
    %2266 = vsyncpa %s2265, 1
    %2267 = vsyncpa [#allocation6], 1
    %s2268 = scalar_lea.sflag [#allocation6], 1
    %2269 = vsyncpa %s2268, 1
    %2270 = vsyncpa [#allocation4], 1
    %s2271 = scalar_lea.sflag [#allocation4], 1
    %2272 = vsyncpa %s2271, 1

</llo_original>
